<compile_context>
chip_gen: v6e
topology: v6e:2x2x1
jax: 0.10.0
libtpu: 0.0.40
codegen_flags: <defaults>
</compile_context>

<pallas_src>
import functools

import jax
import jax.numpy as jnp
from jax.experimental import pallas as pl
from jax.experimental.pallas import tpu as pltpu


# ---------------------------------------------------------------------------
# shared per-step computation (statically unrolled over layers)
# ---------------------------------------------------------------------------
def _gru_stack_step(x, xcat_ref, w_ref, gamma_ref, beta_ref, ssum_ref, sbc_ref,
                    h_read, h_write, *, hidden_size, num_layers, half_width,
                    input_cols):
    """Run the stack of LayerNormedGRUCell layers once.

    x        : (B, P) f32 layer-0 input (already zero-padded to P columns)
    xcat_ref : (B, P + H) bf16 VMEM scratch -- persistent fused [input | hidden]
               MXU operand, updated in place instead of per-layer concatenates.
    h_read(l)        -> (B, H) f32 previous hidden state of layer l
    h_write(l, h_new)   store the new hidden state of layer l
    """
    H = hidden_size
    Wp = half_width                    # 128-aligned width of each gate half
    P = input_cols
    mxu = w_ref.dtype

    xcat_ref[:, :P] = x.astype(mxu)    # layer-0 input: written (and cast) once
    ssum = ssum_ref[...]               # (2*Wp, 8)  scaled 0/1 segment indicators
    sbc = sbc_ref[...]                 # (8, 2*Wp)  0/1 segment broadcast

    for l in range(num_layers):        # static unroll over layers
        h = h_read(l)                                          # (B, H) f32
        xcat_ref[:, P:] = h.astype(mxu)

        # One fused MXU dot per layer: [x_t | h_t] = [inp | h] @ blkdiag(W_in, W_hh)
        xh = jnp.dot(xcat_ref[...], w_ref[l],
                     preferred_element_type=jnp.float32)       # (B, 2*Wp) f32

        # ---- LayerNorm over the 4 gate segments; reductions on the MXU ----
        mean = jnp.dot(xh, ssum, preferred_element_type=jnp.float32)         # (B, 8)
        meansq = jnp.dot(xh * xh, ssum, preferred_element_type=jnp.float32)  # (B, 8)
        var = jnp.maximum(meansq - mean * mean, 0.0)
        rstd = jax.lax.rsqrt(var + 1e-5)
        mean_b = jnp.dot(mean, sbc, preferred_element_type=jnp.float32)      # (B, 2*Wp)
        rstd_b = jnp.dot(rstd, sbc, preferred_element_type=jnp.float32)
        ln = (xh - mean_b) * rstd_b * gamma_ref[l] + beta_ref[l]  # pad cols -> 0

        # ---- gates: slices start at 0 mod 128 or stay inside one lane tile ----
        pre = ln[:, :2 * H] + ln[:, Wp:Wp + 2 * H]             # ln_i2h + ln_h2h
        gates = jax.nn.sigmoid(pre)
        z_t = gates[:, :H]
        r_t = gates[:, H:]
        h_hat = jnp.tanh(ln[:, 2 * H:3 * H] + r_t * ln[:, Wp + 2 * H:Wp + 3 * H])
        h_new = (1.0 - z_t) * h + z_t * h_hat                  # (B, H) f32

        h_write(l, h_new)                                      # direct per-layer store
        if l + 1 < num_layers:
            # Next layer's input.  Stale x columns [H:P] only ever multiply
            # exactly-zero weight rows.  Inter-layer dropout == identity at
            # inference.  TODO(synk): training-mode dropout masks not implemented.
            xcat_ref[:, :H] = h_new.astype(mxu)


# ---------------------------------------------------------------------------
# kernels
# ---------------------------------------------------------------------------
def _stacked_gru_cell_kernel(x_ref, w_ref, gamma_ref, beta_ref, ssum_ref, sbc_ref,
                             hprev_ref, hout_ref, xcat_ref,
                             *, hidden_size, num_layers, half_width, input_cols):
    def h_read(l):
        return hprev_ref[l]

    def h_write(l, h_new):
        hout_ref[l] = h_new

    _gru_stack_step(x_ref[...], xcat_ref, w_ref, gamma_ref, beta_ref,
                    ssum_ref, sbc_ref, h_read, h_write,
                    hidden_size=hidden_size, num_layers=num_layers,
                    half_width=half_width, input_cols=input_cols)


def _stacked_gru_seq_kernel(xs_ref, w_ref, gamma_ref, beta_ref, ssum_ref, sbc_ref,
                            h0_ref, hout_ref, hstate_ref, xcat_ref,
                            *, hidden_size, num_layers, half_width, input_cols):
    @pl.when(pl.program_id(0) == 0)
    def _():
        hstate_ref[...] = h0_ref[...]          # initialize the carried state

    def h_read(l):
        return hstate_ref[l]

    def h_write(l, h_new):
        hstate_ref[l] = h_new                  # carry to next time step
        hout_ref[0, l] = h_new                 # per-step, per-layer output

    _gru_stack_step(xs_ref[0], xcat_ref, w_ref, gamma_ref, beta_ref,
                    ssum_ref, sbc_ref, h_read, h_write,
                    hidden_size=hidden_size, num_layers=num_layers,
                    half_width=half_width, input_cols=input_cols)


# ---------------------------------------------------------------------------
# wrappers
# ---------------------------------------------------------------------------
def _pad_input(x, P):
    in_width = x.shape[-1]
    assert in_width <= P, f"input width {in_width} exceeds packed width {P}"
    if in_width < P:
        pad = [(0, 0)] * (x.ndim - 1) + [(0, P - in_width)]
        x = jnp.pad(x, pad)
    return x


def _vmem_budget_bytes():
    try:
        return int(pltpu.get_tpu_info().vmem_capacity_bytes)
    except Exception:
        return 64 * 1024 * 1024        # v7x per-core VMEM (smallest of v5e/v6e/v7x)


def _vmem_limit_bytes(arrays, headroom_bytes=8 << 20):
    resident = sum(int(a.size) * a.dtype.itemsize for a in arrays)
    budget = int(0.9 * _vmem_budget_bytes())
    need = 2 * resident + headroom_bytes   # x2: layout padding + double-buffered blocks
    if need > budget:
        # TODO(synk): grid-over-layers streamed-weight fallback (double-buffered
        # weight BlockSpec) for configs whose resident weights exceed VMEM
        # (most relevant on v7x's 64 MiB VMEM).
        raise NotImplementedError(
            f"all-resident StackedGRU kernel needs ~{need} B VMEM; budget {budget} B")
    return int(min(budget, need))


def stacked_gru_cell(x, h_prev, w_blk, gamma, beta, seg_sum, seg_bcast):
    """One StackedGRUCell step (module semantics): (B, in), (L, B, H) -> (L, B, H).

    h_prev is aliased onto the output (donated); do not reuse it after the call.
    """
    L, B, H = h_prev.shape
    K = w_blk.shape[1]
    P = K - H
    Wp = w_blk.shape[2] // 2
    x = _pad_input(x, P)

    vmem_limit = _vmem_limit_bytes([x, w_blk, gamma, beta, seg_sum, seg_bcast, h_prev])
    kernel = functools.partial(_stacked_gru_cell_kernel, hidden_size=H,
                               num_layers=L, half_width=Wp, input_cols=P)
    return pl.pallas_call(
        kernel,
        out_shape=jax.ShapeDtypeStruct((L, B, H), jnp.float32),
        in_specs=[pl.BlockSpec(memory_space=pltpu.MemorySpace.VMEM)] * 7,
        out_specs=pl.BlockSpec(memory_space=pltpu.MemorySpace.VMEM),
        scratch_shapes=[pltpu.VMEM((B, K), w_blk.dtype)],
        input_output_aliases={6: 0},             # h_prev -> h_out, in place
        compiler_params=pltpu.CompilerParams(vmem_limit_bytes=vmem_limit),
    )(x, w_blk, gamma, beta, seg_sum, seg_bcast, h_prev)


def stacked_gru_sequence(xs, h0, w_blk, gamma, beta, seg_sum, seg_bcast):
    """Fused time loop: xs (T, B, in), h0 (L, B, H) -> all stacked states (T, L, B, H)."""
    T = xs.shape[0]
    L, B, H = h0.shape
    K = w_blk.shape[1]
    P = K - H
    Wp = w_blk.shape[2] // 2
    xs = _pad_input(xs, P)

    vmem_limit = _vmem_limit_bytes([xs[0], w_blk, gamma, beta, seg_sum, seg_bcast, h0])
    kernel = functools.partial(_stacked_gru_seq_kernel, hidden_size=H,
                               num_layers=L, half_width=Wp, input_cols=P)
    # NOTE: at larger batch, add a leading batch grid axis marked "parallel" to
    # use v7x's second TensorCore; at B=8 it would only add overhead.
    return pl.pallas_call(
        kernel,
        grid=(T,),
        out_shape=jax.ShapeDtypeStruct((T, L, B, H), jnp.float32),
        in_specs=[
            pl.BlockSpec((1, B, P), lambda t: (t, 0, 0)),        # x_t streamed per step
            pl.BlockSpec(w_blk.shape, lambda t: (0, 0, 0)),      # weights resident
            pl.BlockSpec(gamma.shape, lambda t: (0, 0, 0)),
            pl.BlockSpec(beta.shape, lambda t: (0, 0, 0)),
            pl.BlockSpec(seg_sum.shape, lambda t: (0, 0)),
            pl.BlockSpec(seg_bcast.shape, lambda t: (0, 0)),
            pl.BlockSpec(h0.shape, lambda t: (0, 0, 0)),
        ],
        out_specs=pl.BlockSpec((1, L, B, H), lambda t: (t, 0, 0, 0)),
        scratch_shapes=[pltpu.VMEM((L, B, H), jnp.float32),      # carried hidden state
                        pltpu.VMEM((B, K), w_blk.dtype)],        # fused MXU operand
        compiler_params=pltpu.CompilerParams(
            dimension_semantics=("arbitrary",),                  # serial recurrence over t
            vmem_limit_bytes=vmem_limit),
    )(xs, w_blk, gamma, beta, seg_sum, seg_bcast, h0)


# ---------------------------------------------------------------------------
# pure-JAX reference (mirrors the PyTorch LayerNormedGRUCell / StackedGRUCell,
# with the same bf16-operand / f32-accumulate matmul numerics as the kernel)
# ---------------------------------------------------------------------------
def _ref_layer_norm(v, g, b, eps=1e-5):
    m = jnp.mean(v, axis=-1, keepdims=True)
    var = jnp.mean((v - m) ** 2, axis=-1, keepdims=True)
    return (v - m) / jnp.sqrt(var + eps) * g + b


def stacked_gru_reference(x, h_prev, w_in_list, w_hh_list, gamma_nat, beta_nat,
                          hidden_size, mxu_dtype=jnp.bfloat16):
    H = hidden_size
    L = h_prev.shape[0]
    inp = x
    outs = []
    for l in range(L):
        h = h_prev[l]
        x_t = jnp.dot(inp.astype(mxu_dtype), w_in_list[l].astype(mxu_dtype),
                      preferred_element_type=jnp.float32)        # (B, 3H)
        h_t = jnp.dot(h.astype(mxu_dtype), w_hh_list[l].astype(mxu_dtype),
                      preferred_element_type=jnp.float32)        # (B, 3H)
        g, b = gamma_nat[l], beta_nat[l]
        # natural layout: [i2h(2H) | cell1(H) | h2h(2H) | cell2(H)]
        i2h = _ref_layer_norm(x_t[:, :2 * H], g[:2 * H], b[:2 * H])
        c1 = _ref_layer_norm(x_t[:, 2 * H:], g[2 * H:3 * H], b[2 * H:3 * H])
        h2h = _ref_layer_norm(h_t[:, :2 * H], g[3 * H:5 * H], b[3 * H:5 * H])
        c2 = _ref_layer_norm(h_t[:, 2 * H:], g[5 * H:], b[5 * H:])
        gates = jax.nn.sigmoid(i2h + h2h)
        z_t, r_t = gates[:, :H], gates[:, H:]
        h_hat = jnp.tanh(c1 + r_t * c2)
        h_new = (1.0 - z_t) * h + z_t * h_hat
        outs.append(h_new)
        inp = h_new                       # dropout == identity at inference
    return jnp.stack(outs, axis=0)


def stacked_gru_sequence_reference(xs, h0, w_in_list, w_hh_list, gamma_nat,
                                   beta_nat, hidden_size):
    h = h0
    outs = []
    for t in range(xs.shape[0]):
        h = stacked_gru_reference(xs[t], h, w_in_list, w_hh_list,
                                  gamma_nat, beta_nat, hidden_size)
        outs.append(h)
    return jnp.stack(outs, axis=0)


# ---------------------------------------------------------------------------
# deterministic parameter construction + host-side packing
# ---------------------------------------------------------------------------
def make_params(key, input_size, hidden_size, num_layers,
                weight_dtype=jnp.bfloat16):
    H = hidden_size
    W3 = 3 * H
    P = max(input_size, H)                       # padded input width
    K = P + H                                    # fused [input | hidden] width
    Wp = ((W3 + 127) // 128) * 128               # 128-lane aligned gate half
    N = 2 * Wp
    orth = jax.nn.initializers.orthogonal()

    w_in_list, w_hh_list, g_list, b_list = [], [], [], []
    w_blk = jnp.zeros((num_layers, K, N), jnp.float32)
    gamma_p = jnp.zeros((num_layers, 1, N), jnp.float32)
    beta_p = jnp.zeros((num_layers, 1, N), jnp.float32)

    for l in range(num_layers):
        in_l = input_size if l == 0 else H
        key, k1, k2, k3, k4 = jax.random.split(key, 5)
        bound = (3.0 / in_l) ** 0.5              # xavier-uniform (fan_in) analogue
        w_ih = jax.random.uniform(k1, (W3, in_l), jnp.float32, -bound, bound)
        w_hh = orth(k2, (W3, H), jnp.float32)    # orthogonal init
        w_in_t, w_hh_t = w_ih.T, w_hh.T          # (in_l, 3H), (H, 3H)
        w_in_list.append(w_in_t)
        w_hh_list.append(w_hh_t)

        # non-trivial LayerNorm affine params to exercise the packing
        g_nat = 1.0 + 0.1 * jax.random.normal(k3, (6 * H,), jnp.float32)
        b_nat = 0.1 * jax.random.normal(k4, (6 * H,), jnp.float32)
        g_list.append(g_nat)
        b_list.append(b_nat)

        w_blk = w_blk.at[l, :in_l, :W3].set(w_in_t)       # x half (rows 0:P)
        w_blk = w_blk.at[l, P:, Wp:Wp + W3].set(w_hh_t)   # h half (rows P:K)
        gamma_p = gamma_p.at[l, 0, :W3].set(g_nat[:W3])
        gamma_p = gamma_p.at[l, 0, Wp:Wp + W3].set(g_nat[W3:])
        beta_p = beta_p.at[l, 0, :W3].set(b_nat[:W3])
        beta_p = beta_p.at[l, 0, Wp:Wp + W3].set(b_nat[W3:])

    # segment-indicator matrices for the MXU-based LayerNorm reductions
    seg_sum = jnp.zeros((N, 8), jnp.float32)     # columns 4..7 unused (zero)
    seg_bcast = jnp.zeros((8, N), jnp.float32)
    segs = [(0, 2 * H), (2 * H, 3 * H), (Wp, Wp + 2 * H), (Wp + 2 * H, Wp + 3 * H)]
    for s, (lo, hi) in enumerate(segs):
        seg_sum = seg_sum.at[lo:hi, s].set(1.0 / (hi - lo))
        seg_bcast = seg_bcast.at[s, lo:hi].set(1.0)

    return dict(
        w_in_list=w_in_list, w_hh_list=w_hh_list,
        gamma_nat=jnp.stack(g_list), beta_nat=jnp.stack(b_list),
        w_blk=w_blk.astype(weight_dtype), gamma=gamma_p, beta=beta_p,
        seg_sum=seg_sum, seg_bcast=seg_bcast, P=P, Wp=Wp)


if __name__ == "__main__":
    key = jax.random.PRNGKey(0)
    batch = 8
    input_size = 16
    hidden_size = 32
    num_layers = 3
    seq_len = 6

    key, kp, kx, kh = jax.random.split(key, 4)
    params = make_params(kp, input_size, hidden_size, num_layers)

    xs = jax.random.normal(kx, (seq_len, batch, input_size), jnp.float32)
    h0 = jax.random.normal(kh, (num_layers, batch, hidden_size), jnp.float32)

    # References first (the aliased single-step call below donates h0's buffer).
    ref_seq = stacked_gru_sequence_reference(
        xs, h0, params["w_in_list"], params["w_hh_list"],
        params["gamma_nat"], params["beta_nat"], hidden_size)
    ref_seq = jax.block_until_ready(ref_seq)
    ref_step = ref_seq[0]

    # Fused time-loop kernel (primary path).
    out_seq = stacked_gru_sequence(xs, h0, params["w_blk"], params["gamma"],
                                   params["beta"], params["seg_sum"],
                                   params["seg_bcast"])
    out_seq = jax.block_until_ready(out_seq)

    # Single-step kernel (module-equivalent API); h0 is aliased into its output.
    out_step = stacked_gru_cell(xs[0], h0, params["w_blk"], params["gamma"],
                                params["beta"], params["seg_sum"],
                                params["seg_bcast"])
    out_step = jax.block_until_ready(out_step)

    assert out_seq.shape == (seq_len, num_layers, batch, hidden_size)
    assert out_step.shape == (num_layers, batch, hidden_size)

    # Tolerance covers bf16 MXU operands (kernel and reference alike), fused vs.
    # unfused accumulation order, and the one-pass MXU segment-matmul LayerNorm
    # statistics vs. the reference's two-pass f32 form, propagated over L layers
    # and T steps.
    assert jnp.allclose(out_step, ref_step, atol=1e-2, rtol=1e-2), (
        f"cell max abs err {jnp.max(jnp.abs(out_step - ref_step))}")
    assert jnp.allclose(out_seq, ref_seq, atol=1e-2, rtol=1e-2), (
        f"seq max abs err {jnp.max(jnp.abs(out_seq - ref_seq))}")

    print("KERNEL_OK")
</pallas_src>

<mosaic_0001>
module attributes {stable_mosaic.version = 11 : i64} {
  func.func @_stacked_gru_seq_kernel(%arg0: i32, %arg1: memref<1x8x32xf32, #tpu.memory_space<vmem>>, %arg2: memref<3x64x256xbf16, #tpu.memory_space<vmem>>, %arg3: memref<3x1x256xf32, #tpu.memory_space<vmem>>, %arg4: memref<3x1x256xf32, #tpu.memory_space<vmem>>, %arg5: memref<256x8xf32, #tpu.memory_space<vmem>>, %arg6: memref<8x256xf32, #tpu.memory_space<vmem>>, %arg7: memref<3x8x32xf32, #tpu.memory_space<vmem>>, %arg8: memref<1x3x8x32xf32, #tpu.memory_space<vmem>>, %arg9: memref<3x8x32xf32, #tpu.memory_space<vmem>>, %arg10: memref<8x64xbf16, #tpu.memory_space<vmem>>) attributes {dimension_semantics = [#tpu.dimension_semantics<arbitrary>], iteration_bounds = array<i64: 6>, scalar_prefetch = 0 : i64, scratch_operands = 2 : i64, tpu.core_type = #tpu.core_type<tc>, window_params = [{transform_indices = @transform_0, window_bounds = array<i64: 1, 8, 32>}, {pipeline_mode = #tpu.pipeline_mode<synchronous>, transform_indices = @transform_1, window_bounds = array<i64: 3, 64, 256>}, {pipeline_mode = #tpu.pipeline_mode<synchronous>, transform_indices = @transform_2, window_bounds = array<i64: 3, 1, 256>}, {pipeline_mode = #tpu.pipeline_mode<synchronous>, transform_indices = @transform_3, window_bounds = array<i64: 3, 1, 256>}, {pipeline_mode = #tpu.pipeline_mode<synchronous>, transform_indices = @transform_4, window_bounds = array<i64: 256, 8>}, {pipeline_mode = #tpu.pipeline_mode<synchronous>, transform_indices = @transform_5, window_bounds = array<i64: 8, 256>}, {pipeline_mode = #tpu.pipeline_mode<synchronous>, transform_indices = @transform_6, window_bounds = array<i64: 3, 8, 32>}, {transform_indices = @transform_7, window_bounds = array<i64: 1, 3, 8, 32>}]} {
    %c0_i32 = arith.constant 0 : i32
    %0 = arith.cmpi eq, %arg0, %c0_i32 : i32
    %1 = arith.extui %0 : i1 to i32
    %c0_i32_0 = arith.constant 0 : i32
    %2 = arith.cmpi ne, %1, %c0_i32_0 : i32
    scf.if %2 {
      %c0_105 = arith.constant 0 : index
      %c0_106 = arith.constant 0 : index
      %c0_107 = arith.constant 0 : index
      %181 = vector.load %arg7[%c0_105, %c0_106, %c0_107] : memref<3x8x32xf32, #tpu.memory_space<vmem>>, vector<3x8x32xf32>
      %c0_108 = arith.constant 0 : index
      %c0_109 = arith.constant 0 : index
      %c0_110 = arith.constant 0 : index
      %182 = vector.load %arg9[%c0_108, %c0_109, %c0_110] : memref<3x8x32xf32, #tpu.memory_space<vmem>>, vector<3x8x32xf32>
      tpu.vector_store %arg9[%c0_108, %c0_109, %c0_110], %181 {strides = array<i32>} : memref<3x8x32xf32, #tpu.memory_space<vmem>>, vector<3x8x32xf32>,
    } else {
    }
    %c0 = arith.constant 0 : index
    %c0_1 = arith.constant 0 : index
    %c0_2 = arith.constant 0 : index
    %3 = vector.load %arg1[%c0, %c0_1, %c0_2] : memref<1x8x32xf32, #tpu.memory_space<vmem>>, vector<1x8x32xf32>
    %4 = vector.shape_cast %3 : vector<1x8x32xf32> to vector<8x32xf32>
    %5 = arith.truncf %4 : vector<8x32xf32> to vector<8x32xbf16>
    %c0_3 = arith.constant 0 : index
    %c0_4 = arith.constant 0 : index
    %6 = vector.load %arg10[%c0_3, %c0_4] : memref<8x64xbf16, #tpu.memory_space<vmem>>, vector<8x32xbf16>
    tpu.vector_store %arg10[%c0_3, %c0_4], %5 {strides = array<i32>} : memref<8x64xbf16, #tpu.memory_space<vmem>>, vector<8x32xbf16>,
    %c0_5 = arith.constant 0 : index
    %c0_6 = arith.constant 0 : index
    %7 = vector.load %arg5[%c0_5, %c0_6] : memref<256x8xf32, #tpu.memory_space<vmem>>, vector<256x8xf32>
    %c0_7 = arith.constant 0 : index
    %c0_8 = arith.constant 0 : index
    %8 = vector.load %arg6[%c0_7, %c0_8] : memref<8x256xf32, #tpu.memory_space<vmem>>, vector<8x256xf32>
    %c0_9 = arith.constant 0 : index
    %c0_10 = arith.constant 0 : index
    %c0_11 = arith.constant 0 : index
    %9 = vector.load %arg9[%c0_9, %c0_10, %c0_11] : memref<3x8x32xf32, #tpu.memory_space<vmem>>, vector<1x8x32xf32>
    %10 = vector.shape_cast %9 : vector<1x8x32xf32> to vector<8x32xf32>
    %11 = arith.truncf %10 : vector<8x32xf32> to vector<8x32xbf16>
    %c0_12 = arith.constant 0 : index
    %c32 = arith.constant 32 : index
    %12 = vector.load %arg10[%c0_12, %c32] : memref<8x64xbf16, #tpu.memory_space<vmem>>, vector<8x32xbf16>
    tpu.vector_store %arg10[%c0_12, %c32], %11 {strides = array<i32>} : memref<8x64xbf16, #tpu.memory_space<vmem>>, vector<8x32xbf16>,
    %c0_13 = arith.constant 0 : index
    %c0_14 = arith.constant 0 : index
    %13 = vector.load %arg10[%c0_13, %c0_14] : memref<8x64xbf16, #tpu.memory_space<vmem>>, vector<8x64xbf16>
    %c0_15 = arith.constant 0 : index
    %c0_16 = arith.constant 0 : index
    %c0_17 = arith.constant 0 : index
    %14 = vector.load %arg2[%c0_15, %c0_16, %c0_17] : memref<3x64x256xbf16, #tpu.memory_space<vmem>>, vector<1x64x256xbf16>
    %15 = vector.shape_cast %14 : vector<1x64x256xbf16> to vector<64x256xbf16>
    %cst = arith.constant dense<0.000000e+00> : vector<8x256xf32>
    %16 = tpu.matmul %13, %15, %cst {dimension_numbers = #tpu.dot_dimension_numbers<[1], [0], [0], [1], [0, 0, 1, 1], [], []>} : vector<8x64xbf16>, vector<64x256xbf16>, vector<8x256xf32> -> vector<8x256xf32>
    %cst_18 = arith.constant dense<0.000000e+00> : vector<8x8xf32>
    %17 = tpu.matmul %16, %7, %cst_18 {dimension_numbers = #tpu.dot_dimension_numbers<[1], [0], [0], [1], [0, 0, 1, 1], [], []>} : vector<8x256xf32>, vector<256x8xf32>, vector<8x8xf32> -> vector<8x8xf32>
    %18 = arith.mulf %16, %16 : vector<8x256xf32>
    %cst_19 = arith.constant dense<0.000000e+00> : vector<8x8xf32>
    %19 = tpu.matmul %18, %7, %cst_19 {dimension_numbers = #tpu.dot_dimension_numbers<[1], [0], [0], [1], [0, 0, 1, 1], [], []>} : vector<8x256xf32>, vector<256x8xf32>, vector<8x8xf32> -> vector<8x8xf32>
    %20 = arith.mulf %17, %17 : vector<8x8xf32>
    %21 = arith.subf %19, %20 : vector<8x8xf32>
    %cst_20 = arith.constant 0.000000e+00 : f32
    %22 = vector.broadcast %cst_20 : f32 to vector<8x8xf32>
    %23 = arith.maximumf %21, %22 : vector<8x8xf32>
    %cst_21 = arith.constant 9.99999974E-6 : f32
    %24 = vector.broadcast %cst_21 : f32 to vector<8x8xf32>
    %25 = arith.addf %23, %24 : vector<8x8xf32>
    %26 = math.rsqrt %25 : vector<8x8xf32>
    %cst_22 = arith.constant dense<0.000000e+00> : vector<8x256xf32>
    %27 = tpu.matmul %17, %8, %cst_22 {dimension_numbers = #tpu.dot_dimension_numbers<[1], [0], [0], [1], [0, 0, 1, 1], [], []>} : vector<8x8xf32>, vector<8x256xf32>, vector<8x256xf32> -> vector<8x256xf32>
    %cst_23 = arith.constant dense<0.000000e+00> : vector<8x256xf32>
    %28 = tpu.matmul %26, %8, %cst_23 {dimension_numbers = #tpu.dot_dimension_numbers<[1], [0], [0], [1], [0, 0, 1, 1], [], []>} : vector<8x8xf32>, vector<8x256xf32>, vector<8x256xf32> -> vector<8x256xf32>
    %29 = arith.subf %16, %27 : vector<8x256xf32>
    %30 = arith.mulf %29, %28 : vector<8x256xf32>
    %c0_24 = arith.constant 0 : index
    %c0_25 = arith.constant 0 : index
    %c0_26 = arith.constant 0 : index
    %31 = vector.load %arg3[%c0_24, %c0_25, %c0_26] : memref<3x1x256xf32, #tpu.memory_space<vmem>>, vector<1x1x256xf32>
    %32 = vector.shape_cast %31 : vector<1x1x256xf32> to vector<1x256xf32>
    %33 = vector.broadcast %32 : vector<1x256xf32> to vector<8x256xf32>
    %34 = arith.mulf %30, %33 : vector<8x256xf32>
    %c0_27 = arith.constant 0 : index
    %c0_28 = arith.constant 0 : index
    %c0_29 = arith.constant 0 : index
    %35 = vector.load %arg4[%c0_27, %c0_28, %c0_29] : memref<3x1x256xf32, #tpu.memory_space<vmem>>, vector<1x1x256xf32>
    %36 = vector.shape_cast %35 : vector<1x1x256xf32> to vector<1x256xf32>
    %37 = vector.broadcast %36 : vector<1x256xf32> to vector<8x256xf32>
    %38 = arith.addf %34, %37 : vector<8x256xf32>
    %39 = vector.extract_strided_slice %38 {offsets = [0, 0], sizes = [8, 64], strides = [1, 1]} : vector<8x256xf32> to vector<8x64xf32>
    %40 = vector.extract_strided_slice %38 {offsets = [0, 128], sizes = [8, 64], strides = [1, 1]} : vector<8x256xf32> to vector<8x64xf32>
    %41 = arith.addf %39, %40 : vector<8x64xf32>
    %42 = arith.negf %41 : vector<8x64xf32>
    %43 = math.exp %42 : vector<8x64xf32>
    %cst_30 = arith.constant 1.000000e+00 : f32
    %44 = vector.broadcast %cst_30 : f32 to vector<8x64xf32>
    %45 = arith.addf %44, %43 : vector<8x64xf32>
    %46 = arith.divf %44, %45 : vector<8x64xf32>
    %47 = vector.extract_strided_slice %46 {offsets = [0, 0], sizes = [8, 32], strides = [1, 1]} : vector<8x64xf32> to vector<8x32xf32>
    %48 = vector.extract_strided_slice %46 {offsets = [0, 32], sizes = [8, 32], strides = [1, 1]} : vector<8x64xf32> to vector<8x32xf32>
    %49 = vector.extract_strided_slice %38 {offsets = [0, 64], sizes = [8, 32], strides = [1, 1]} : vector<8x256xf32> to vector<8x32xf32>
    %50 = vector.extract_strided_slice %38 {offsets = [0, 192], sizes = [8, 32], strides = [1, 1]} : vector<8x256xf32> to vector<8x32xf32>
    %51 = arith.mulf %48, %50 : vector<8x32xf32>
    %52 = arith.addf %49, %51 : vector<8x32xf32>
    %53 = math.tanh %52 : vector<8x32xf32>
    %cst_31 = arith.constant 1.000000e+00 : f32
    %54 = vector.broadcast %cst_31 : f32 to vector<8x32xf32>
    %55 = arith.subf %54, %47 : vector<8x32xf32>
    %56 = arith.mulf %55, %10 : vector<8x32xf32>
    %57 = arith.mulf %47, %53 : vector<8x32xf32>
    %58 = arith.addf %56, %57 : vector<8x32xf32>
    %c0_32 = arith.constant 0 : index
    %c0_33 = arith.constant 0 : index
    %c0_34 = arith.constant 0 : index
    %59 = vector.load %arg9[%c0_32, %c0_33, %c0_34] : memref<3x8x32xf32, #tpu.memory_space<vmem>>, vector<1x8x32xf32>
    %60 = vector.shape_cast %59 : vector<1x8x32xf32> to vector<8x32xf32>
    %61 = vector.shape_cast %58 : vector<8x32xf32> to vector<1x8x32xf32>
    tpu.vector_store %arg9[%c0_32, %c0_33, %c0_34], %61 {strides = array<i32>} : memref<3x8x32xf32, #tpu.memory_space<vmem>>, vector<1x8x32xf32>,
    %c0_35 = arith.constant 0 : index
    %c0_36 = arith.constant 0 : index
    %c0_37 = arith.constant 0 : index
    %c0_38 = arith.constant 0 : index
    %62 = vector.load %arg8[%c0_35, %c0_36, %c0_37, %c0_38] : memref<1x3x8x32xf32, #tpu.memory_space<vmem>>, vector<1x1x8x32xf32>
    %63 = vector.shape_cast %62 : vector<1x1x8x32xf32> to vector<8x32xf32>
    %64 = vector.shape_cast %58 : vector<8x32xf32> to vector<1x1x8x32xf32>
    tpu.vector_store %arg8[%c0_35, %c0_36, %c0_37, %c0_38], %64 {strides = array<i32>} : memref<1x3x8x32xf32, #tpu.memory_space<vmem>>, vector<1x1x8x32xf32>,
    %65 = arith.truncf %58 : vector<8x32xf32> to vector<8x32xbf16>
    %c0_39 = arith.constant 0 : index
    %c0_40 = arith.constant 0 : index
    %66 = vector.load %arg10[%c0_39, %c0_40] : memref<8x64xbf16, #tpu.memory_space<vmem>>, vector<8x32xbf16>
    tpu.vector_store %arg10[%c0_39, %c0_40], %65 {strides = array<i32>} : memref<8x64xbf16, #tpu.memory_space<vmem>>, vector<8x32xbf16>,
    %c1 = arith.constant 1 : index
    %c0_41 = arith.constant 0 : index
    %c0_42 = arith.constant 0 : index
    %67 = vector.load %arg9[%c1, %c0_41, %c0_42] : memref<3x8x32xf32, #tpu.memory_space<vmem>>, vector<1x8x32xf32>
    %68 = vector.shape_cast %67 : vector<1x8x32xf32> to vector<8x32xf32>
    %69 = arith.truncf %68 : vector<8x32xf32> to vector<8x32xbf16>
    %c0_43 = arith.constant 0 : index
    %c32_44 = arith.constant 32 : index
    %70 = vector.load %arg10[%c0_43, %c32_44] : memref<8x64xbf16, #tpu.memory_space<vmem>>, vector<8x32xbf16>
    tpu.vector_store %arg10[%c0_43, %c32_44], %69 {strides = array<i32>} : memref<8x64xbf16, #tpu.memory_space<vmem>>, vector<8x32xbf16>,
    %c0_45 = arith.constant 0 : index
    %c0_46 = arith.constant 0 : index
    %71 = vector.load %arg10[%c0_45, %c0_46] : memref<8x64xbf16, #tpu.memory_space<vmem>>, vector<8x64xbf16>
    %c1_47 = arith.constant 1 : index
    %c0_48 = arith.constant 0 : index
    %c0_49 = arith.constant 0 : index
    %72 = vector.load %arg2[%c1_47, %c0_48, %c0_49] : memref<3x64x256xbf16, #tpu.memory_space<vmem>>, vector<1x64x256xbf16>
    %73 = vector.shape_cast %72 : vector<1x64x256xbf16> to vector<64x256xbf16>
    %cst_50 = arith.constant dense<0.000000e+00> : vector<8x256xf32>
    %74 = tpu.matmul %71, %73, %cst_50 {dimension_numbers = #tpu.dot_dimension_numbers<[1], [0], [0], [1], [0, 0, 1, 1], [], []>} : vector<8x64xbf16>, vector<64x256xbf16>, vector<8x256xf32> -> vector<8x256xf32>
    %cst_51 = arith.constant dense<0.000000e+00> : vector<8x8xf32>
    %75 = tpu.matmul %74, %7, %cst_51 {dimension_numbers = #tpu.dot_dimension_numbers<[1], [0], [0], [1], [0, 0, 1, 1], [], []>} : vector<8x256xf32>, vector<256x8xf32>, vector<8x8xf32> -> vector<8x8xf32>
    %76 = arith.mulf %74, %74 : vector<8x256xf32>
    %cst_52 = arith.constant dense<0.000000e+00> : vector<8x8xf32>
    %77 = tpu.matmul %76, %7, %cst_52 {dimension_numbers = #tpu.dot_dimension_numbers<[1], [0], [0], [1], [0, 0, 1, 1], [], []>} : vector<8x256xf32>, vector<256x8xf32>, vector<8x8xf32> -> vector<8x8xf32>
    %78 = arith.mulf %75, %75 : vector<8x8xf32>
    %79 = arith.subf %77, %78 : vector<8x8xf32>
    %cst_53 = arith.constant 0.000000e+00 : f32
    %80 = vector.broadcast %cst_53 : f32 to vector<8x8xf32>
    %81 = arith.maximumf %79, %80 : vector<8x8xf32>
    %cst_54 = arith.constant 9.99999974E-6 : f32
    %82 = vector.broadcast %cst_54 : f32 to vector<8x8xf32>
    %83 = arith.addf %81, %82 : vector<8x8xf32>
    %84 = math.rsqrt %83 : vector<8x8xf32>
    %cst_55 = arith.constant dense<0.000000e+00> : vector<8x256xf32>
    %85 = tpu.matmul %75, %8, %cst_55 {dimension_numbers = #tpu.dot_dimension_numbers<[1], [0], [0], [1], [0, 0, 1, 1], [], []>} : vector<8x8xf32>, vector<8x256xf32>, vector<8x256xf32> -> vector<8x256xf32>
    %cst_56 = arith.constant dense<0.000000e+00> : vector<8x256xf32>
    %86 = tpu.matmul %84, %8, %cst_56 {dimension_numbers = #tpu.dot_dimension_numbers<[1], [0], [0], [1], [0, 0, 1, 1], [], []>} : vector<8x8xf32>, vector<8x256xf32>, vector<8x256xf32> -> vector<8x256xf32>
    %87 = arith.subf %74, %85 : vector<8x256xf32>
    %88 = arith.mulf %87, %86 : vector<8x256xf32>
    %c1_57 = arith.constant 1 : index
    %c0_58 = arith.constant 0 : index
    %c0_59 = arith.constant 0 : index
    %89 = vector.load %arg3[%c1_57, %c0_58, %c0_59] : memref<3x1x256xf32, #tpu.memory_space<vmem>>, vector<1x1x256xf32>
    %90 = vector.shape_cast %89 : vector<1x1x256xf32> to vector<1x256xf32>
    %91 = vector.broadcast %90 : vector<1x256xf32> to vector<8x256xf32>
    %92 = arith.mulf %88, %91 : vector<8x256xf32>
    %c1_60 = arith.constant 1 : index
    %c0_61 = arith.constant 0 : index
    %c0_62 = arith.constant 0 : index
    %93 = vector.load %arg4[%c1_60, %c0_61, %c0_62] : memref<3x1x256xf32, #tpu.memory_space<vmem>>, vector<1x1x256xf32>
    %94 = vector.shape_cast %93 : vector<1x1x256xf32> to vector<1x256xf32>
    %95 = vector.broadcast %94 : vector<1x256xf32> to vector<8x256xf32>
    %96 = arith.addf %92, %95 : vector<8x256xf32>
    %97 = vector.extract_strided_slice %96 {offsets = [0, 0], sizes = [8, 64], strides = [1, 1]} : vector<8x256xf32> to vector<8x64xf32>
    %98 = vector.extract_strided_slice %96 {offsets = [0, 128], sizes = [8, 64], strides = [1, 1]} : vector<8x256xf32> to vector<8x64xf32>
    %99 = arith.addf %97, %98 : vector<8x64xf32>
    %100 = arith.negf %99 : vector<8x64xf32>
    %101 = math.exp %100 : vector<8x64xf32>
    %cst_63 = arith.constant 1.000000e+00 : f32
    %102 = vector.broadcast %cst_63 : f32 to vector<8x64xf32>
    %103 = arith.addf %102, %101 : vector<8x64xf32>
    %104 = arith.divf %102, %103 : vector<8x64xf32>
    %105 = vector.extract_strided_slice %104 {offsets = [0, 0], sizes = [8, 32], strides = [1, 1]} : vector<8x64xf32> to vector<8x32xf32>
    %106 = vector.extract_strided_slice %104 {offsets = [0, 32], sizes = [8, 32], strides = [1, 1]} : vector<8x64xf32> to vector<8x32xf32>
    %107 = vector.extract_strided_slice %96 {offsets = [0, 64], sizes = [8, 32], strides = [1, 1]} : vector<8x256xf32> to vector<8x32xf32>
    %108 = vector.extract_strided_slice %96 {offsets = [0, 192], sizes = [8, 32], strides = [1, 1]} : vector<8x256xf32> to vector<8x32xf32>
    %109 = arith.mulf %106, %108 : vector<8x32xf32>
    %110 = arith.addf %107, %109 : vector<8x32xf32>
    %111 = math.tanh %110 : vector<8x32xf32>
    %cst_64 = arith.constant 1.000000e+00 : f32
    %112 = vector.broadcast %cst_64 : f32 to vector<8x32xf32>
    %113 = arith.subf %112, %105 : vector<8x32xf32>
    %114 = arith.mulf %113, %68 : vector<8x32xf32>
    %115 = arith.mulf %105, %111 : vector<8x32xf32>
    %116 = arith.addf %114, %115 : vector<8x32xf32>
    %c1_65 = arith.constant 1 : index
    %c0_66 = arith.constant 0 : index
    %c0_67 = arith.constant 0 : index
    %117 = vector.load %arg9[%c1_65, %c0_66, %c0_67] : memref<3x8x32xf32, #tpu.memory_space<vmem>>, vector<1x8x32xf32>
    %118 = vector.shape_cast %117 : vector<1x8x32xf32> to vector<8x32xf32>
    %119 = vector.shape_cast %116 : vector<8x32xf32> to vector<1x8x32xf32>
    tpu.vector_store %arg9[%c1_65, %c0_66, %c0_67], %119 {strides = array<i32>} : memref<3x8x32xf32, #tpu.memory_space<vmem>>, vector<1x8x32xf32>,
    %c0_68 = arith.constant 0 : index
    %c1_69 = arith.constant 1 : index
    %c0_70 = arith.constant 0 : index
    %c0_71 = arith.constant 0 : index
    %120 = vector.load %arg8[%c0_68, %c1_69, %c0_70, %c0_71] : memref<1x3x8x32xf32, #tpu.memory_space<vmem>>, vector<1x1x8x32xf32>
    %121 = vector.shape_cast %120 : vector<1x1x8x32xf32> to vector<8x32xf32>
    %122 = vector.shape_cast %116 : vector<8x32xf32> to vector<1x1x8x32xf32>
    tpu.vector_store %arg8[%c0_68, %c1_69, %c0_70, %c0_71], %122 {strides = array<i32>} : memref<1x3x8x32xf32, #tpu.memory_space<vmem>>, vector<1x1x8x32xf32>,
    %123 = arith.truncf %116 : vector<8x32xf32> to vector<8x32xbf16>
    %c0_72 = arith.constant 0 : index
    %c0_73 = arith.constant 0 : index
    %124 = vector.load %arg10[%c0_72, %c0_73] : memref<8x64xbf16, #tpu.memory_space<vmem>>, vector<8x32xbf16>
    tpu.vector_store %arg10[%c0_72, %c0_73], %123 {strides = array<i32>} : memref<8x64xbf16, #tpu.memory_space<vmem>>, vector<8x32xbf16>,
    %c2 = arith.constant 2 : index
    %c0_74 = arith.constant 0 : index
    %c0_75 = arith.constant 0 : index
    %125 = vector.load %arg9[%c2, %c0_74, %c0_75] : memref<3x8x32xf32, #tpu.memory_space<vmem>>, vector<1x8x32xf32>
    %126 = vector.shape_cast %125 : vector<1x8x32xf32> to vector<8x32xf32>
    %127 = arith.truncf %126 : vector<8x32xf32> to vector<8x32xbf16>
    %c0_76 = arith.constant 0 : index
    %c32_77 = arith.constant 32 : index
    %128 = vector.load %arg10[%c0_76, %c32_77] : memref<8x64xbf16, #tpu.memory_space<vmem>>, vector<8x32xbf16>
    tpu.vector_store %arg10[%c0_76, %c32_77], %127 {strides = array<i32>} : memref<8x64xbf16, #tpu.memory_space<vmem>>, vector<8x32xbf16>,
    %c0_78 = arith.constant 0 : index
    %c0_79 = arith.constant 0 : index
    %129 = vector.load %arg10[%c0_78, %c0_79] : memref<8x64xbf16, #tpu.memory_space<vmem>>, vector<8x64xbf16>
    %c2_80 = arith.constant 2 : index
    %c0_81 = arith.constant 0 : index
    %c0_82 = arith.constant 0 : index
    %130 = vector.load %arg2[%c2_80, %c0_81, %c0_82] : memref<3x64x256xbf16, #tpu.memory_space<vmem>>, vector<1x64x256xbf16>
    %131 = vector.shape_cast %130 : vector<1x64x256xbf16> to vector<64x256xbf16>
    %cst_83 = arith.constant dense<0.000000e+00> : vector<8x256xf32>
    %132 = tpu.matmul %129, %131, %cst_83 {dimension_numbers = #tpu.dot_dimension_numbers<[1], [0], [0], [1], [0, 0, 1, 1], [], []>} : vector<8x64xbf16>, vector<64x256xbf16>, vector<8x256xf32> -> vector<8x256xf32>
    %cst_84 = arith.constant dense<0.000000e+00> : vector<8x8xf32>
    %133 = tpu.matmul %132, %7, %cst_84 {dimension_numbers = #tpu.dot_dimension_numbers<[1], [0], [0], [1], [0, 0, 1, 1], [], []>} : vector<8x256xf32>, vector<256x8xf32>, vector<8x8xf32> -> vector<8x8xf32>
    %134 = arith.mulf %132, %132 : vector<8x256xf32>
    %cst_85 = arith.constant dense<0.000000e+00> : vector<8x8xf32>
    %135 = tpu.matmul %134, %7, %cst_85 {dimension_numbers = #tpu.dot_dimension_numbers<[1], [0], [0], [1], [0, 0, 1, 1], [], []>} : vector<8x256xf32>, vector<256x8xf32>, vector<8x8xf32> -> vector<8x8xf32>
    %136 = arith.mulf %133, %133 : vector<8x8xf32>
    %137 = arith.subf %135, %136 : vector<8x8xf32>
    %cst_86 = arith.constant 0.000000e+00 : f32
    %138 = vector.broadcast %cst_86 : f32 to vector<8x8xf32>
    %139 = arith.maximumf %137, %138 : vector<8x8xf32>
    %cst_87 = arith.constant 9.99999974E-6 : f32
    %140 = vector.broadcast %cst_87 : f32 to vector<8x8xf32>
    %141 = arith.addf %139, %140 : vector<8x8xf32>
    %142 = math.rsqrt %141 : vector<8x8xf32>
    %cst_88 = arith.constant dense<0.000000e+00> : vector<8x256xf32>
    %143 = tpu.matmul %133, %8, %cst_88 {dimension_numbers = #tpu.dot_dimension_numbers<[1], [0], [0], [1], [0, 0, 1, 1], [], []>} : vector<8x8xf32>, vector<8x256xf32>, vector<8x256xf32> -> vector<8x256xf32>
    %cst_89 = arith.constant dense<0.000000e+00> : vector<8x256xf32>
    %144 = tpu.matmul %142, %8, %cst_89 {dimension_numbers = #tpu.dot_dimension_numbers<[1], [0], [0], [1], [0, 0, 1, 1], [], []>} : vector<8x8xf32>, vector<8x256xf32>, vector<8x256xf32> -> vector<8x256xf32>
    %145 = arith.subf %132, %143 : vector<8x256xf32>
    %146 = arith.mulf %145, %144 : vector<8x256xf32>
    %c2_90 = arith.constant 2 : index
    %c0_91 = arith.constant 0 : index
    %c0_92 = arith.constant 0 : index
    %147 = vector.load %arg3[%c2_90, %c0_91, %c0_92] : memref<3x1x256xf32, #tpu.memory_space<vmem>>, vector<1x1x256xf32>
    %148 = vector.shape_cast %147 : vector<1x1x256xf32> to vector<1x256xf32>
    %149 = vector.broadcast %148 : vector<1x256xf32> to vector<8x256xf32>
    %150 = arith.mulf %146, %149 : vector<8x256xf32>
    %c2_93 = arith.constant 2 : index
    %c0_94 = arith.constant 0 : index
    %c0_95 = arith.constant 0 : index
    %151 = vector.load %arg4[%c2_93, %c0_94, %c0_95] : memref<3x1x256xf32, #tpu.memory_space<vmem>>, vector<1x1x256xf32>
    %152 = vector.shape_cast %151 : vector<1x1x256xf32> to vector<1x256xf32>
    %153 = vector.broadcast %152 : vector<1x256xf32> to vector<8x256xf32>
    %154 = arith.addf %150, %153 : vector<8x256xf32>
    %155 = vector.extract_strided_slice %154 {offsets = [0, 0], sizes = [8, 64], strides = [1, 1]} : vector<8x256xf32> to vector<8x64xf32>
    %156 = vector.extract_strided_slice %154 {offsets = [0, 128], sizes = [8, 64], strides = [1, 1]} : vector<8x256xf32> to vector<8x64xf32>
    %157 = arith.addf %155, %156 : vector<8x64xf32>
    %158 = arith.negf %157 : vector<8x64xf32>
    %159 = math.exp %158 : vector<8x64xf32>
    %cst_96 = arith.constant 1.000000e+00 : f32
    %160 = vector.broadcast %cst_96 : f32 to vector<8x64xf32>
    %161 = arith.addf %160, %159 : vector<8x64xf32>
    %162 = arith.divf %160, %161 : vector<8x64xf32>
    %163 = vector.extract_strided_slice %162 {offsets = [0, 0], sizes = [8, 32], strides = [1, 1]} : vector<8x64xf32> to vector<8x32xf32>
    %164 = vector.extract_strided_slice %162 {offsets = [0, 32], sizes = [8, 32], strides = [1, 1]} : vector<8x64xf32> to vector<8x32xf32>
    %165 = vector.extract_strided_slice %154 {offsets = [0, 64], sizes = [8, 32], strides = [1, 1]} : vector<8x256xf32> to vector<8x32xf32>
    %166 = vector.extract_strided_slice %154 {offsets = [0, 192], sizes = [8, 32], strides = [1, 1]} : vector<8x256xf32> to vector<8x32xf32>
    %167 = arith.mulf %164, %166 : vector<8x32xf32>
    %168 = arith.addf %165, %167 : vector<8x32xf32>
    %169 = math.tanh %168 : vector<8x32xf32>
    %cst_97 = arith.constant 1.000000e+00 : f32
    %170 = vector.broadcast %cst_97 : f32 to vector<8x32xf32>
    %171 = arith.subf %170, %163 : vector<8x32xf32>
    %172 = arith.mulf %171, %126 : vector<8x32xf32>
    %173 = arith.mulf %163, %169 : vector<8x32xf32>
    %174 = arith.addf %172, %173 : vector<8x32xf32>
    %c2_98 = arith.constant 2 : index
    %c0_99 = arith.constant 0 : index
    %c0_100 = arith.constant 0 : index
    %175 = vector.load %arg9[%c2_98, %c0_99, %c0_100] : memref<3x8x32xf32, #tpu.memory_space<vmem>>, vector<1x8x32xf32>
    %176 = vector.shape_cast %175 : vector<1x8x32xf32> to vector<8x32xf32>
    %177 = vector.shape_cast %174 : vector<8x32xf32> to vector<1x8x32xf32>
    tpu.vector_store %arg9[%c2_98, %c0_99, %c0_100], %177 {strides = array<i32>} : memref<3x8x32xf32, #tpu.memory_space<vmem>>, vector<1x8x32xf32>,
    %c0_101 = arith.constant 0 : index
    %c2_102 = arith.constant 2 : index
    %c0_103 = arith.constant 0 : index
    %c0_104 = arith.constant 0 : index
    %178 = vector.load %arg8[%c0_101, %c2_102, %c0_103, %c0_104] : memref<1x3x8x32xf32, #tpu.memory_space<vmem>>, vector<1x1x8x32xf32>
    %179 = vector.shape_cast %178 : vector<1x1x8x32xf32> to vector<8x32xf32>
    %180 = vector.shape_cast %174 : vector<8x32xf32> to vector<1x1x8x32xf32>
    tpu.vector_store %arg8[%c0_101, %c2_102, %c0_103, %c0_104], %180 {strides = array<i32>} : memref<1x3x8x32xf32, #tpu.memory_space<vmem>>, vector<1x1x8x32xf32>,
    return
  }
  func.func @transform_0(%arg0: i32) -> (i32, i32, i32) {
    %c0_i32 = arith.constant 0 : i32
    %c0_i32_0 = arith.constant 0 : i32
    %c0_i32_1 = arith.constant 0 : i32
    return %arg0, %c0_i32, %c0_i32_0 : i32, i32, i32
  }
  func.func @transform_1(%arg0: i32) -> (i32, i32, i32) {
    %c0_i32 = arith.constant 0 : i32
    %c0_i32_0 = arith.constant 0 : i32
    %c0_i32_1 = arith.constant 0 : i32
    %c0_i32_2 = arith.constant 0 : i32
    return %c0_i32, %c0_i32_0, %c0_i32_1 : i32, i32, i32
  }
  func.func @transform_2(%arg0: i32) -> (i32, i32, i32) {
    %c0_i32 = arith.constant 0 : i32
    %c0_i32_0 = arith.constant 0 : i32
    %c0_i32_1 = arith.constant 0 : i32
    %c0_i32_2 = arith.constant 0 : i32
    return %c0_i32, %c0_i32_0, %c0_i32_1 : i32, i32, i32
  }
  func.func @transform_3(%arg0: i32) -> (i32, i32, i32) {
    %c0_i32 = arith.constant 0 : i32
    %c0_i32_0 = arith.constant 0 : i32
    %c0_i32_1 = arith.constant 0 : i32
    %c0_i32_2 = arith.constant 0 : i32
    return %c0_i32, %c0_i32_0, %c0_i32_1 : i32, i32, i32
  }
  func.func @transform_4(%arg0: i32) -> (i32, i32) {
    %c0_i32 = arith.constant 0 : i32
    %c0_i32_0 = arith.constant 0 : i32
    %c0_i32_1 = arith.constant 0 : i32
    return %c0_i32, %c0_i32_0 : i32, i32
  }
  func.func @transform_5(%arg0: i32) -> (i32, i32) {
    %c0_i32 = arith.constant 0 : i32
    %c0_i32_0 = arith.constant 0 : i32
    %c0_i32_1 = arith.constant 0 : i32
    return %c0_i32, %c0_i32_0 : i32, i32
  }
  func.func @transform_6(%arg0: i32) -> (i32, i32, i32) {
    %c0_i32 = arith.constant 0 : i32
    %c0_i32_0 = arith.constant 0 : i32
    %c0_i32_1 = arith.constant 0 : i32
    %c0_i32_2 = arith.constant 0 : i32
    return %c0_i32, %c0_i32_0, %c0_i32_1 : i32, i32, i32
  }
  func.func @transform_7(%arg0: i32) -> (i32, i32, i32, i32) {
    %c0_i32 = arith.constant 0 : i32
    %c0_i32_0 = arith.constant 0 : i32
    %c0_i32_1 = arith.constant 0 : i32
    %c0_i32_2 = arith.constant 0 : i32
    return %arg0, %c0_i32, %c0_i32_0, %c0_i32_1 : i32, i32, i32, i32
  }
}

</mosaic_0001>

<llo_original>
// kernel: tpu_custom_call.1
$region0: #{tpu_custom_call.1}
  #allocation0 [shape = 'u32[]', space=smem, size = 0x4, offset = 0x4, fixed_abs, tag = 'smem constant byte address 0x4 - core index']
  #allocation1 [shape = 'u32[144,128]{1,0:T(1,128)}', space=vmem, size = 0x12000, scoped, tag = 'internal scratch']
  #allocation2 [shape = 'f32[3,8,32]{2,1,0:T(8,128)}', space=vmem, size = 0x3000, scoped, tag = 'scratch operand']
  #allocation3 [shape = 'bf16[8,64]{1,0:T(8,128)(2,1)}', space=vmem, size = 0x800, scoped, tag = 'scratch operand']
  %s0 = inlined_call_operand.vmem [shape: f32[6,8,32], index: 0, kind: input, shape index: {}]
  %s1 = inlined_call_operand.vmem [shape: bf16[3,64,256], index: 1, kind: input, shape index: {}]
  %s2 = inlined_call_operand.vmem [shape: f32[3,1,256], index: 2, kind: input, shape index: {}]
  %s3 = inlined_call_operand.hbm [shape: f32[3,1,256], index: 3, kind: input, shape index: {}]
  %s4 = inlined_call_operand.vmem [shape: f32[256,8], index: 4, kind: input, shape index: {}]
  %s5 = inlined_call_operand.hbm [shape: f32[8,256], index: 5, kind: input, shape index: {}]
  %s6 = inlined_call_operand.vmem [shape: f32[3,8,32], index: 6, kind: input, shape index: {}]
  %s7 = inlined_call_operand.hbm [shape: f32[6,3,8,32], index: 7, kind: output, shape index: {}]
  %s8 = sld [smem:[#allocation0]]
  $region73: #{tpu_custom_call.1} parent=0
    _
  %s10 = ssub.s32 1, %s8
  %s11 = scalar_select 0, %s10, %s8
  $region1: #{tpu_custom_call.1} parent=0
    #allocation4 [shape = 'u8[3072]{0}', space=vmem, size = 0xc00, scoped, tag = 'input window, operand 3, single buffered']
    #allocation5 [shape = 's32[2]{0}', space=sflag, size = 0x8, scoped, tag = 'scoped memory for tpu_custom_call.1']
    #allocation6 [shape = 's32[2]{0}', space=sflag, size = 0x8, scoped, tag = 'scoped memory for tpu_custom_call.1']
    #allocation7 [shape = 'u8[8192]{0}', space=vmem, size = 0x2000, scoped, tag = 'input window, operand 5, single buffered']
    #allocation8 [shape = 's32[1]{0}', space=sflag, size = 0x4, scoped, tag = 'scoped memory for tpu_custom_call.1']
    #allocation9 [shape = 'u8[24576]{0}', space=vmem, size = 0x6000, scoped, tag = 'output window, operand 0']
    %12 = vsyncpa [#allocation5], 0
    %13 = vsyncpa [#allocation8], 0
    %14 = vsyncpa [#allocation6], 0
    %s15 = scalar_lea.sflag [#allocation6], 1
    %16 = vsyncpa %s15, 0
    loop: start=0, step=1, limit=8
    $region2: #{tpu_custom_call.1} parent=1 // loop_pre_header
      _
    $region3: #{tpu_custom_call.1} parent=1 // loop_header
      %s18 = sphi 0, %s22
      %p19 = scmp.ge.s32.totalorder %s18, 8
      %s28 = sphi 0, %s30
      %s31 = sphi 0, %s28
      %s32 = sphi 0, %s31
      %s48 = sphi 0, %s32
      %s52 = sphi 0, %s52
      %s54 = sphi 0, %s52
      %s55 = sphi 0, %s54
      %s69 = sphi 0, %s55
      %s73 = sphi 0, %s73
      %s75 = sphi 0, %s73
      %s76 = sphi 0, %s75
      %s90 = sphi 0, %s76
      %s94 = sphi 0, %s94
      %s96 = sphi 0, %s94
      %s97 = sphi 0, %s96
      %s111 = sphi 0, %s97
      %s115 = sphi 0, %s115
      %s117 = sphi 0, %s115
      %s118 = sphi 0, %s117
      %s132 = sphi 0, %s118
      %s136 = sphi 0, %s136
      %s138 = sphi 0, %s136
      %s139 = sphi 0, %s138
      %s153 = sphi 0, %s139
      %s157 = sphi 0, %s157
      %s159 = sphi 0, %s157
      %s160 = sphi 0, %s159
      %s174 = sphi 0, %s160
      %s180 = sphi 0, %s182
      %s183 = sphi 0, %s180
      %s184 = sphi 0, %s183
      %s200 = sphi 0, %s184
    $region4: #{tpu_custom_call.1} parent=1 // loop_header_branch
      %21 = sbr.rel (%p19) target = $region8
    $region5: #{tpu_custom_call.1} parent=1 // loop_body
      %s23 = ssub.s32 %s18, 1
      %s24 = ssub.s32 %s18, 2
      %s25 = sadd.s32 %s18, 1
      %s26 = ssub.s32 %s18, %s25
      %p27 = scmp.eq.s32.totalorder %s26, 0
      %s29 = sadd.s32 %s28, 1
      %s30 = scalar_select %p27, %s28, %s29
      %p33 = pneg %p27
      %p34 = scmp.eq.s32.totalorder %s18, 5
      %p35 = por %p33, %p34
      %p36 = scmp.ne.s32.totalorder %s28, %s31
      %p37 = scmp.eq.s32.totalorder %s18, 0
      %p38 = por %p36, %p37
      %p39 = scmp.ne.s32.totalorder %s28, %s31
      %p40 = scmp.eq.s32.totalorder %s23, 5
      %p41 = por %p39, %p40
      %p42 = scmp.ne.s32.totalorder %s31, %s32
      %p43 = scmp.eq.s32.totalorder %s23, 0
      %p44 = por %p42, %p43
      %p45 = scmp.ne.s32.totalorder %s31, %s32
      %p46 = scmp.eq.s32.totalorder %s24, 5
      %p47 = por %p45, %p46
      %p49 = scmp.ne.s32.totalorder %s32, %s48
      %p50 = scmp.eq.s32.totalorder %s24, 0
      %p51 = por %p49, %p50
      %s53 = sadd.s32 %s52, 1
      %p56 = scmp.eq.s32.totalorder %s18, 5
      %p57 = scmp.ne.s32.totalorder %s52, %s54
      %p58 = scmp.eq.s32.totalorder %s18, 0
      %p59 = por %p57, %p58
      %p60 = scmp.ne.s32.totalorder %s52, %s54
      %p61 = scmp.eq.s32.totalorder %s23, 5
      %p62 = por %p60, %p61
      %p63 = scmp.ne.s32.totalorder %s54, %s55
      %p64 = scmp.eq.s32.totalorder %s23, 0
      %p65 = por %p63, %p64
      %p66 = scmp.ne.s32.totalorder %s54, %s55
      %p67 = scmp.eq.s32.totalorder %s24, 5
      %p68 = por %p66, %p67
      %p70 = scmp.ne.s32.totalorder %s55, %s69
      %p71 = scmp.eq.s32.totalorder %s24, 0
      %p72 = por %p70, %p71
      %s74 = sadd.s32 %s73, 1
      %p77 = scmp.eq.s32.totalorder %s18, 5
      %p78 = scmp.ne.s32.totalorder %s73, %s75
      %p79 = scmp.eq.s32.totalorder %s18, 0
      %p80 = por %p78, %p79
      %p81 = scmp.ne.s32.totalorder %s73, %s75
      %p82 = scmp.eq.s32.totalorder %s23, 5
      %p83 = por %p81, %p82
      %p84 = scmp.ne.s32.totalorder %s75, %s76
      %p85 = scmp.eq.s32.totalorder %s23, 0
      %p86 = por %p84, %p85
      %p87 = scmp.ne.s32.totalorder %s75, %s76
      %p88 = scmp.eq.s32.totalorder %s24, 5
      %p89 = por %p87, %p88
      %p91 = scmp.ne.s32.totalorder %s76, %s90
      %p92 = scmp.eq.s32.totalorder %s24, 0
      %p93 = por %p91, %p92
      %s95 = sadd.s32 %s94, 1
      %p98 = scmp.eq.s32.totalorder %s18, 5
      %p99 = scmp.ne.s32.totalorder %s94, %s96
      %p100 = scmp.eq.s32.totalorder %s18, 0
      %p101 = por %p99, %p100
      %p102 = scmp.ne.s32.totalorder %s94, %s96
      %p103 = scmp.eq.s32.totalorder %s23, 5
      %p104 = por %p102, %p103
      %p105 = scmp.ne.s32.totalorder %s96, %s97
      %p106 = scmp.eq.s32.totalorder %s23, 0
      %p107 = por %p105, %p106
      %p108 = scmp.ne.s32.totalorder %s96, %s97
      %p109 = scmp.eq.s32.totalorder %s24, 5
      %p110 = por %p108, %p109
      %p112 = scmp.ne.s32.totalorder %s97, %s111
      %p113 = scmp.eq.s32.totalorder %s24, 0
      %p114 = por %p112, %p113
      %s116 = sadd.s32 %s115, 1
      %p119 = scmp.eq.s32.totalorder %s18, 5
      %p120 = scmp.ne.s32.totalorder %s115, %s117
      %p121 = scmp.eq.s32.totalorder %s18, 0
      %p122 = por %p120, %p121
      %p123 = scmp.ne.s32.totalorder %s115, %s117
      %p124 = scmp.eq.s32.totalorder %s23, 5
      %p125 = por %p123, %p124
      %p126 = scmp.ne.s32.totalorder %s117, %s118
      %p127 = scmp.eq.s32.totalorder %s23, 0
      %p128 = por %p126, %p127
      %p129 = scmp.ne.s32.totalorder %s117, %s118
      %p130 = scmp.eq.s32.totalorder %s24, 5
      %p131 = por %p129, %p130
      %p133 = scmp.ne.s32.totalorder %s118, %s132
      %p134 = scmp.eq.s32.totalorder %s24, 0
      %p135 = por %p133, %p134
      %s137 = sadd.s32 %s136, 1
      %p140 = scmp.eq.s32.totalorder %s18, 5
      %p141 = scmp.ne.s32.totalorder %s136, %s138
      %p142 = scmp.eq.s32.totalorder %s18, 0
      %p143 = por %p141, %p142
      %p144 = scmp.ne.s32.totalorder %s136, %s138
      %p145 = scmp.eq.s32.totalorder %s23, 5
      %p146 = por %p144, %p145
      %p147 = scmp.ne.s32.totalorder %s138, %s139
      %p148 = scmp.eq.s32.totalorder %s23, 0
      %p149 = por %p147, %p148
      %p150 = scmp.ne.s32.totalorder %s138, %s139
      %p151 = scmp.eq.s32.totalorder %s24, 5
      %p152 = por %p150, %p151
      %p154 = scmp.ne.s32.totalorder %s139, %s153
      %p155 = scmp.eq.s32.totalorder %s24, 0
      %p156 = por %p154, %p155
      %s158 = sadd.s32 %s157, 1
      %p161 = scmp.eq.s32.totalorder %s18, 5
      %p162 = scmp.ne.s32.totalorder %s157, %s159
      %p163 = scmp.eq.s32.totalorder %s18, 0
      %p164 = por %p162, %p163
      %p165 = scmp.ne.s32.totalorder %s157, %s159
      %p166 = scmp.eq.s32.totalorder %s23, 5
      %p167 = por %p165, %p166
      %p168 = scmp.ne.s32.totalorder %s159, %s160
      %p169 = scmp.eq.s32.totalorder %s23, 0
      %p170 = por %p168, %p169
      %p171 = scmp.ne.s32.totalorder %s159, %s160
      %p172 = scmp.eq.s32.totalorder %s24, 5
      %p173 = por %p171, %p172
      %p175 = scmp.ne.s32.totalorder %s160, %s174
      %p176 = scmp.eq.s32.totalorder %s24, 0
      %p177 = por %p175, %p176
      %s178 = ssub.s32 %s18, %s25
      %p179 = scmp.eq.s32.totalorder %s178, 0
      %s181 = sadd.s32 %s180, 1
      %s182 = scalar_select %p179, %s180, %s181
      %p185 = pneg %p179
      %p186 = scmp.eq.s32.totalorder %s18, 5
      %p187 = por %p185, %p186
      %p188 = scmp.ne.s32.totalorder %s180, %s183
      %p189 = scmp.eq.s32.totalorder %s18, 0
      %p190 = por %p188, %p189
      %p191 = scmp.ne.s32.totalorder %s180, %s183
      %p192 = scmp.eq.s32.totalorder %s23, 5
      %p193 = por %p191, %p192
      %p194 = scmp.ne.s32.totalorder %s183, %s184
      %p195 = scmp.eq.s32.totalorder %s23, 0
      %p196 = por %p194, %p195
      %p197 = scmp.ne.s32.totalorder %s183, %s184
      %p198 = scmp.eq.s32.totalorder %s24, 5
      %p199 = por %p197, %p198
      %p201 = scmp.ne.s32.totalorder %s184, %s200
      %p202 = scmp.eq.s32.totalorder %s24, 0
      %p203 = por %p201, %p202
      %p204 = scmp.le.s32.totalorder 1, %s18
      %p205 = scmp.lt.s32.totalorder %s18, 7
      %p206 = pnand %p204, %p205
      %p207 = pneg %p206
      // Predicated region
      $region9: #{tpu_custom_call.1} parent=5 // pred_check
        _
      $region10: #{tpu_custom_call.1} parent=5 // pred_check_branch
        %209 = sbr.rel (%p206) target = $region12
      $region11: #{tpu_custom_call.1} parent=5 // pred_region
        %s210 = ssub.s32 %s18, 1
        // Predicated region
        $region13: #{tpu_custom_call.1} parent=11 // pred_check
          %p211 = pneg %p65
        $region14: #{tpu_custom_call.1} parent=11 // pred_check_branch
          %213 = sbr.rel (%p211) target = $region16
        $region15: #{tpu_custom_call.1} parent=11 // pred_region
          _
        $region16: #{tpu_custom_call.1} parent=11 // pred_fallthru
          _
        // Predicated region
        $region17: #{tpu_custom_call.1} parent=11 // pred_check
          %p214 = pneg %p86
        $region18: #{tpu_custom_call.1} parent=11 // pred_check_branch
          %216 = sbr.rel (%p214) target = $region20
        $region19: #{tpu_custom_call.1} parent=11 // pred_region
          _
        $region20: #{tpu_custom_call.1} parent=11 // pred_fallthru
          _
        // Predicated region
        $region21: #{tpu_custom_call.1} parent=11 // pred_check
          %p217 = pneg %p107
        $region22: #{tpu_custom_call.1} parent=11 // pred_check_branch
          %219 = sbr.rel (%p217) target = $region24
        $region23: #{tpu_custom_call.1} parent=11 // pred_region
          %s221 = ssub.s32 96, 96
          %222 = vsyncadd [#allocation5], %s221
          %s223 = sshll.u32 [#allocation4], 4
          %s224 = int_to_ptr.vmem [resolvable:$true] %s223
          %229 = dma.hbm_to_vmem [thread:$0]  %s3, 96, %s224, [#allocation5], 32, 32, 2
        $region24: #{tpu_custom_call.1} parent=11 // pred_fallthru
          _
        // Predicated region
        $region25: #{tpu_custom_call.1} parent=11 // pred_check
          %p230 = pneg %p128
        $region26: #{tpu_custom_call.1} parent=11 // pred_check_branch
          %232 = sbr.rel (%p230) target = $region28
        $region27: #{tpu_custom_call.1} parent=11 // pred_region
          _
        $region28: #{tpu_custom_call.1} parent=11 // pred_fallthru
          _
        // Predicated region
        $region29: #{tpu_custom_call.1} parent=11 // pred_check
          %p233 = pneg %p149
        $region30: #{tpu_custom_call.1} parent=11 // pred_check_branch
          %235 = sbr.rel (%p233) target = $region32
        $region31: #{tpu_custom_call.1} parent=11 // pred_region
          %s237 = ssub.s32 256, 256
          %238 = vsyncadd [#allocation8], %s237
          %s240 = sshll.u32 [#allocation7], 4
          %s241 = int_to_ptr.vmem [resolvable:$true] %s240
          %243 = dma.hbm_to_vmem [thread:$0]  %s5, 256, %s241, [#allocation8]
        $region32: #{tpu_custom_call.1} parent=11 // pred_fallthru
          _
        // Predicated region
        $region33: #{tpu_custom_call.1} parent=11 // pred_check
          %p244 = pneg %p170
        $region34: #{tpu_custom_call.1} parent=11 // pred_check_branch
          %246 = sbr.rel (%p244) target = $region36
        $region35: #{tpu_custom_call.1} parent=11 // pred_region
          _
        $region36: #{tpu_custom_call.1} parent=11 // pred_fallthru
          _
      $region12: #{tpu_custom_call.1} parent=5 // pred_fallthru
        _
      %p247 = scmp.lt.s32.totalorder %s18, 6
      // Predicated region
      $region37: #{tpu_custom_call.1} parent=5 // pred_check
        %p248 = pneg %p247
      $region38: #{tpu_custom_call.1} parent=5 // pred_check_branch
        %250 = sbr.rel (%p248) target = $region40
      $region39: #{tpu_custom_call.1} parent=5 // pred_region
        // Predicated region
        $region41: #{tpu_custom_call.1} parent=39 // pred_check
          %p251 = pneg %p38
        $region42: #{tpu_custom_call.1} parent=39 // pred_check_branch
          %253 = sbr.rel (%p251) target = $region44
        $region43: #{tpu_custom_call.1} parent=39 // pred_region
          %p254 = scmp.lt.s32.totalorder %s18, 5
          %s255 = scalar_select %p254, %s18, 5
          %s256 = smul.addr %s255, 8
          %s257 = scalar_lea.vmem %s0, %s256
        $region44: #{tpu_custom_call.1} parent=39 // pred_fallthru
          _
      $region40: #{tpu_custom_call.1} parent=5 // pred_fallthru
        _
      %p258 = scmp.le.s32.totalorder 1, %s18
      %p259 = scmp.lt.s32.totalorder %s18, 7
      %p260 = pnand %p258, %p259
      %p261 = pneg %p260
      // Predicated region
      $region45: #{tpu_custom_call.1} parent=5 // pred_check
        _
      $region46: #{tpu_custom_call.1} parent=5 // pred_check_branch
        %263 = sbr.rel (%p260) target = $region48
      $region47: #{tpu_custom_call.1} parent=5 // pred_region
        %s264 = ssub.s32 %s18, 1
        // Predicated region
        $region49: #{tpu_custom_call.1} parent=47 // pred_check
          %p265 = pneg %p107
        $region50: #{tpu_custom_call.1} parent=47 // pred_check_branch
          %267 = sbr.rel (%p265) target = $region52
        $region51: #{tpu_custom_call.1} parent=47 // pred_region
          %268 = dma.done [#allocation5], 96
        $region52: #{tpu_custom_call.1} parent=47 // pred_fallthru
          _
        // Predicated region
        $region53: #{tpu_custom_call.1} parent=47 // pred_check
          %p269 = pneg %p149
        $region54: #{tpu_custom_call.1} parent=47 // pred_check_branch
          %271 = sbr.rel (%p269) target = $region56
        $region55: #{tpu_custom_call.1} parent=47 // pred_region
          %272 = dma.done [#allocation8], 256
        $region56: #{tpu_custom_call.1} parent=47 // pred_fallthru
          _
        %p273 = scmp.lt.s32.totalorder %s23, 5
        %s274 = scalar_select %p273, %s23, 5
        %s275 = smul.addr %s274, 8
        %s276 = scalar_lea.vmem %s0, %s275
        %p277 = pneg %p44
        %p278 = pneg %p41
        %p279 = pneg %p65
        %p280 = pneg %p62
        %p281 = pneg %p86
        %p282 = pneg %p83
        %p283 = pneg %p107
        %p284 = pneg %p104
        %p285 = pneg %p128
        %p286 = pneg %p125
        %p287 = pneg %p149
        %p288 = pneg %p146
        %p289 = pneg %p170
        %p290 = pneg %p167
        %p291 = pneg %p196
        %p292 = pneg %p193
        %s293 = sand.u32 %s183, 1
        %s294 = scalar_lea.sflag [#allocation6], %s293
        %s295 = sand.u32 %s183, 1
        %s296 = smul.addr %s295, 24
        %s297 = scalar_lea.vmem [#allocation9], %s296
        %p298 = scmp.lt.s32.totalorder %s23, 5
        %s299 = scalar_select %p298, %s23, 5
        %s300 = smul.addr %s299, 8
        %s301 = scalar_lea.vmem %s0, %s300
        %p303 = scmp.eq.s32.totalorder %s23, 0
        // Predicated region
        $region57: #{tpu_custom_call.1} parent=47 // pred_check
          %p304 = pneg %p303
        $region58: #{tpu_custom_call.1} parent=47 // pred_check_branch
          %306 = sbr.rel (%p304) target = $region60
        $region59: #{tpu_custom_call.1} parent=47 // pred_region
          %v307 = vld [vmem:[%s6] sm:$0xff]
          %v308 = vld [vmem:[%s6 + $0x8] sm:$0xff]
          %v309 = vld [vmem:[%s6 + $0x10] sm:$0xff]
          %vm310 = vcmask 261120
          %311 = vst.msk [vmem:[#allocation2] sm:$0xff] %vm310, %v307
          %312 = vst.msk [vmem:[#allocation2 + $0x8] sm:$0xff] %vm310, %v308
          %313 = vst.msk [vmem:[#allocation2 + $0x10] sm:$0xff] %vm310, %v309
        $region60: #{tpu_custom_call.1} parent=47 // pred_fallthru
          _
        %v314 = vld [vmem:[%s301] sm:$0xff]
        %v315 = vpack.c.bf16 %v314, %v314
        %vm316 = vcmask 257024
        %317 = vst.msk [vmem:[#allocation3] sm:$0xf] %vm316, %v315
        %v318 = vld [vmem:[%s4] sm:$0xff]
        %v319 = vld [vmem:[%s4 + $0x8] sm:$0xff]
        %v320 = vld [vmem:[%s4 + $0x10] sm:$0xff]
        %v321 = vld [vmem:[%s4 + $0x18] sm:$0xff]
        %v322 = vld [vmem:[%s4 + $0x20] sm:$0xff]
        %v323 = vld [vmem:[%s4 + $0x28] sm:$0xff]
        %v324 = vld [vmem:[%s4 + $0x30] sm:$0xff]
        %v325 = vld [vmem:[%s4 + $0x38] sm:$0xff]
        %v326 = vld [vmem:[%s4 + $0x40] sm:$0xff]
        %v327 = vld [vmem:[%s4 + $0x48] sm:$0xff]
        %v328 = vld [vmem:[%s4 + $0x50] sm:$0xff]
        %v329 = vld [vmem:[%s4 + $0x58] sm:$0xff]
        %v330 = vld [vmem:[%s4 + $0x60] sm:$0xff]
        %v331 = vld [vmem:[%s4 + $0x68] sm:$0xff]
        %v332 = vld [vmem:[%s4 + $0x70] sm:$0xff]
        %v333 = vld [vmem:[%s4 + $0x78] sm:$0xff]
        %v334 = vld [vmem:[%s4 + $0x80] sm:$0xff]
        %v335 = vld [vmem:[%s4 + $0x88] sm:$0xff]
        %v336 = vld [vmem:[%s4 + $0x90] sm:$0xff]
        %v337 = vld [vmem:[%s4 + $0x98] sm:$0xff]
        %v338 = vld [vmem:[%s4 + $0xa0] sm:$0xff]
        %v339 = vld [vmem:[%s4 + $0xa8] sm:$0xff]
        %v340 = vld [vmem:[%s4 + $0xb0] sm:$0xff]
        %v341 = vld [vmem:[%s4 + $0xb8] sm:$0xff]
        %v342 = vld [vmem:[%s4 + $0xc0] sm:$0xff]
        %v343 = vld [vmem:[%s4 + $0xc8] sm:$0xff]
        %v344 = vld [vmem:[%s4 + $0xd0] sm:$0xff]
        %v345 = vld [vmem:[%s4 + $0xd8] sm:$0xff]
        %v346 = vld [vmem:[%s4 + $0xe0] sm:$0xff]
        %v347 = vld [vmem:[%s4 + $0xe8] sm:$0xff]
        %v348 = vld [vmem:[%s4 + $0xf0] sm:$0xff]
        %v349 = vld [vmem:[%s4 + $0xf8] sm:$0xff]
        %v350 = vld [vmem:[#allocation7] sm:$0xff]
        %v351 = vld [vmem:[#allocation7 + $0x8] sm:$0xff]
        %v352 = vld [vmem:[#allocation2] sm:$0xff]
        %v353 = vpack.c.bf16 %v352, %v352
        %v355 = vunpack.c.l.b16 %v353
        %v356 = vpack.c.b16 %v355, %v355
        %357 = vrot.lane.b32.xlu0 %v356, 32
        %v358 = vpop.permute.xlu0 %357
        %vm360 = vcmask 519424
        %361 = vst.msk [vmem:[#allocation3] sm:$0xf] %vm360, %v358
        %v362 = vld [vmem:[#allocation3] sm:$0xf]
        %v363 = vld [vmem:[%s1] sm:$0xff]
        %v364 = vld [vmem:[%s1 + $0x8] sm:$0xff]
        %v365 = vld [vmem:[%s1 + $0x10] sm:$0xff]
        %v366 = vld [vmem:[%s1 + $0x18] sm:$0xff]
        %v367 = vld [vmem:[%s1 + $0x20] sm:$0xff]
        %v368 = vld [vmem:[%s1 + $0x28] sm:$0xff]
        %v369 = vld [vmem:[%s1 + $0x30] sm:$0xff]
        %v370 = vld [vmem:[%s1 + $0x38] sm:$0xff]
        %v379 = vunpack.c.l.b16 %v363
        %v380 = vunpack.c.h.b16 %v363
        %v381 = vunpack.c.l.b16 %v364
        %v382 = vunpack.c.h.b16 %v364
        %v383 = vunpack.c.l.b16 %v365
        %v384 = vunpack.c.h.b16 %v365
        %v385 = vunpack.c.l.b16 %v366
        %v386 = vunpack.c.h.b16 %v366
        %v387 = vunpack.c.l.b16 %v367
        %v388 = vunpack.c.h.b16 %v367
        %v389 = vunpack.c.l.b16 %v368
        %v390 = vunpack.c.h.b16 %v368
        %v391 = vunpack.c.l.b16 %v369
        %v392 = vunpack.c.h.b16 %v369
        %v393 = vunpack.c.l.b16 %v370
        %v394 = vunpack.c.h.b16 %v370
        %v395 = vpack.c.b16 %v381, %v379
        %v396 = vpack.c.b16 %v382, %v380
        %v397 = vpack.c.b16 %v385, %v383
        %v398 = vpack.c.b16 %v386, %v384
        %v399 = vpack.c.b16 %v389, %v387
        %v400 = vpack.c.b16 %v390, %v388
        %v401 = vpack.c.b16 %v393, %v391
        %v402 = vpack.c.b16 %v394, %v392
        %vm411 = vcmask 523264
        %v413 = vsel %vm411, %v362, 0
        %415 = vmatprep.subr.bf16.mxu0 0
        %416 = vmatpush1.bf16.msra.mxu0 0
        %417 = vmatprep.subr.bf16.mxu0 0
        %418 = vmatpush1.bf16.msra.mxu0 0
        %419 = vmatprep.subr.bf16.mxu0 0
        %420 = vmatpush1.bf16.msra.mxu0 0
        %421 = vmatprep.subr.bf16.mxu0 0
        %422 = vmatpush1.bf16.msra.mxu0 0
        %423 = vmatprep.subr.bf16.mxu0 %v402
        %424 = vmatpush1.bf16.msra.mxu0 %v401
        %425 = vmatprep.subr.bf16.mxu0 %v400
        %426 = vmatpush1.bf16.msra.mxu0 %v399
        %427 = vmatprep.subr.bf16.mxu0 %v398
        %428 = vmatpush1.bf16.msra.mxu0 %v397
        %429 = vmatprep.subr.bf16.mxu0 %v396
        %430 = vmatpush1.bf16.msra.mxu0 %v395
        %431 = vmatprep.subr.bf16.mxu0 0
        %432 = vmatpush2.bf16.msra.mxu0 0
        %433 = vmatprep.subr.bf16.mxu0 0
        %434 = vmatpush2.bf16.msra.mxu0 0
        %435 = vmatprep.subr.bf16.mxu0 0
        %436 = vmatpush2.bf16.msra.mxu0 0
        %437 = vmatprep.subr.bf16.mxu0 0
        %438 = vmatpush2.bf16.msra.mxu0 0
        %439 = vmatprep.subr.bf16.mxu0 0
        %440 = vmatpush2.bf16.msra.mxu0 0
        %441 = vmatprep.subr.bf16.mxu0 0
        %442 = vmatpush2.bf16.msra.mxu0 0
        %443 = vmatprep.subr.bf16.mxu0 0
        %444 = vmatpush2.bf16.msra.mxu0 0
        %445 = vmatprep.subr.bf16.mxu0 0
        %446 = vmatpush2.bf16.msra.mxu0 0
        %447 = vmatprep.mubr.bf16.mxu0 0
        %448 = vmatmul.mubr.bf16.gmra.mxu0 %v413
        %v449 = vpop.f32.mrf.mxu0
        %v450 = vadd.f32 0.0, %v449
        %v451 = vpop.f32.mrf.mxu0
        %v452 = vadd.f32 0.0, %v451
        %v453 = vpop.f32.mrf.mxu0
        %v454 = vpop.f32.mrf.mxu0
        %455 = vdwg.mxu0
        %456 = vmatprep.subr.mxu0 0.0
        %457 = vmatpush1.msra.mxu0 %v333
        %458 = vmatprep.subr.mxu0 0.0
        %459 = vmatpush1.msra.mxu0 %v332
        %460 = vmatprep.subr.mxu0 0.0
        %461 = vmatpush1.msra.mxu0 %v331
        %462 = vmatprep.subr.mxu0 0.0
        %463 = vmatpush1.msra.mxu0 %v330
        %464 = vmatprep.subr.mxu0 0.0
        %465 = vmatpush1.msra.mxu0 %v329
        %466 = vmatprep.subr.mxu0 0.0
        %467 = vmatpush1.msra.mxu0 %v328
        %468 = vmatprep.subr.mxu0 0.0
        %469 = vmatpush1.msra.mxu0 %v327
        %470 = vmatprep.subr.mxu0 0.0
        %471 = vmatpush1.msra.mxu0 %v326
        %472 = vmatprep.subr.mxu0 0.0
        %473 = vmatpush1.msra.mxu0 %v325
        %474 = vmatprep.subr.mxu0 0.0
        %475 = vmatpush1.msra.mxu0 %v324
        %476 = vmatprep.subr.mxu0 0.0
        %477 = vmatpush1.msra.mxu0 %v323
        %478 = vmatprep.subr.mxu0 0.0
        %479 = vmatpush1.msra.mxu0 %v322
        %480 = vmatprep.subr.mxu0 0.0
        %481 = vmatpush1.msra.mxu0 %v321
        %482 = vmatprep.subr.mxu0 0.0
        %483 = vmatpush1.msra.mxu0 %v320
        %484 = vmatprep.subr.mxu0 0.0
        %485 = vmatpush1.msra.mxu0 %v319
        %486 = vmatprep.subr.mxu0 0.0
        %487 = vmatpush1.msra.mxu0 %v318
        %488 = vmatprep.subr.mxu0 0.0
        %489 = vmatpush2.msra.mxu0 %v349
        %490 = vmatprep.subr.mxu0 0.0
        %491 = vmatpush2.msra.mxu0 %v348
        %492 = vmatprep.subr.mxu0 0.0
        %493 = vmatpush2.msra.mxu0 %v347
        %494 = vmatprep.subr.mxu0 0.0
        %495 = vmatpush2.msra.mxu0 %v346
        %496 = vmatprep.subr.mxu0 0.0
        %497 = vmatpush2.msra.mxu0 %v345
        %498 = vmatprep.subr.mxu0 0.0
        %499 = vmatpush2.msra.mxu0 %v344
        %500 = vmatprep.subr.mxu0 0.0
        %501 = vmatpush2.msra.mxu0 %v343
        %502 = vmatprep.subr.mxu0 0.0
        %503 = vmatpush2.msra.mxu0 %v342
        %504 = vmatprep.subr.mxu0 0.0
        %505 = vmatpush2.msra.mxu0 %v341
        %506 = vmatprep.subr.mxu0 0.0
        %507 = vmatpush2.msra.mxu0 %v340
        %508 = vmatprep.subr.mxu0 0.0
        %509 = vmatpush2.msra.mxu0 %v339
        %510 = vmatprep.subr.mxu0 0.0
        %511 = vmatpush2.msra.mxu0 %v338
        %512 = vmatprep.subr.mxu0 0.0
        %513 = vmatpush2.msra.mxu0 %v337
        %514 = vmatprep.subr.mxu0 0.0
        %515 = vmatpush2.msra.mxu0 %v336
        %516 = vmatprep.subr.mxu0 0.0
        %517 = vmatpush2.msra.mxu0 %v335
        %518 = vmatprep.subr.mxu0 0.0
        %519 = vmatpush2.msra.mxu0 %v334
        %520 = vmatprep.mubr.f32.mxu0 %v452
        %521 = vmatmul.mubr.f32.gmra.mxu0 %v450
        %v522 = vpop.f32.mrf.mxu0
        %v523 = vadd.f32 0.0, %v522
        %v524 = vpop.f32.mrf.mxu0
        %525 = vdwg.mxu0
        %v526 = vmul.f32 %v450, %v450
        %v527 = vmul.f32 %v452, %v452
        %528 = vmatprep.subr.mxu0 0.0
        %529 = vmatpush1.msra.mxu0 %v333
        %530 = vmatprep.subr.mxu0 0.0
        %531 = vmatpush1.msra.mxu0 %v332
        %532 = vmatprep.subr.mxu0 0.0
        %533 = vmatpush1.msra.mxu0 %v331
        %534 = vmatprep.subr.mxu0 0.0
        %535 = vmatpush1.msra.mxu0 %v330
        %536 = vmatprep.subr.mxu0 0.0
        %537 = vmatpush1.msra.mxu0 %v329
        %538 = vmatprep.subr.mxu0 0.0
        %539 = vmatpush1.msra.mxu0 %v328
        %540 = vmatprep.subr.mxu0 0.0
        %541 = vmatpush1.msra.mxu0 %v327
        %542 = vmatprep.subr.mxu0 0.0
        %543 = vmatpush1.msra.mxu0 %v326
        %544 = vmatprep.subr.mxu0 0.0
        %545 = vmatpush1.msra.mxu0 %v325
        %546 = vmatprep.subr.mxu0 0.0
        %547 = vmatpush1.msra.mxu0 %v324
        %548 = vmatprep.subr.mxu0 0.0
        %549 = vmatpush1.msra.mxu0 %v323
        %550 = vmatprep.subr.mxu0 0.0
        %551 = vmatpush1.msra.mxu0 %v322
        %552 = vmatprep.subr.mxu0 0.0
        %553 = vmatpush1.msra.mxu0 %v321
        %554 = vmatprep.subr.mxu0 0.0
        %555 = vmatpush1.msra.mxu0 %v320
        %556 = vmatprep.subr.mxu0 0.0
        %557 = vmatpush1.msra.mxu0 %v319
        %558 = vmatprep.subr.mxu0 0.0
        %559 = vmatpush1.msra.mxu0 %v318
        %560 = vmatprep.subr.mxu0 0.0
        %561 = vmatpush2.msra.mxu0 %v349
        %562 = vmatprep.subr.mxu0 0.0
        %563 = vmatpush2.msra.mxu0 %v348
        %564 = vmatprep.subr.mxu0 0.0
        %565 = vmatpush2.msra.mxu0 %v347
        %566 = vmatprep.subr.mxu0 0.0
        %567 = vmatpush2.msra.mxu0 %v346
        %568 = vmatprep.subr.mxu0 0.0
        %569 = vmatpush2.msra.mxu0 %v345
        %570 = vmatprep.subr.mxu0 0.0
        %571 = vmatpush2.msra.mxu0 %v344
        %572 = vmatprep.subr.mxu0 0.0
        %573 = vmatpush2.msra.mxu0 %v343
        %574 = vmatprep.subr.mxu0 0.0
        %575 = vmatpush2.msra.mxu0 %v342
        %576 = vmatprep.subr.mxu0 0.0
        %577 = vmatpush2.msra.mxu0 %v341
        %578 = vmatprep.subr.mxu0 0.0
        %579 = vmatpush2.msra.mxu0 %v340
        %580 = vmatprep.subr.mxu0 0.0
        %581 = vmatpush2.msra.mxu0 %v339
        %582 = vmatprep.subr.mxu0 0.0
        %583 = vmatpush2.msra.mxu0 %v338
        %584 = vmatprep.subr.mxu0 0.0
        %585 = vmatpush2.msra.mxu0 %v337
        %586 = vmatprep.subr.mxu0 0.0
        %587 = vmatpush2.msra.mxu0 %v336
        %588 = vmatprep.subr.mxu0 0.0
        %589 = vmatpush2.msra.mxu0 %v335
        %590 = vmatprep.subr.mxu0 0.0
        %591 = vmatpush2.msra.mxu0 %v334
        %592 = vmatprep.mubr.f32.mxu0 %v527
        %593 = vmatmul.mubr.f32.gmra.mxu0 %v526
        %v594 = vpop.f32.mrf.mxu0
        %v595 = vadd.f32 0.0, %v594
        %v596 = vpop.f32.mrf.mxu0
        %597 = vdwg.mxu0
        %v598 = vmul.f32 %v523, %v523
        %v599 = vsub.f32 %v595, %v598
        %v600 = vmax.f32 %v599, 0.0
        %v601 = vadd.f32 %v600, 1e-05
        %v602 = vrsqrt.pop %v601
        %vm603 = vcmask 64512
        %v605 = vsel %vm603, %v523, 0
        %607 = vmatprep.subr.mxu0 0.0
        %608 = vmatpush1.msra.mxu0 0.0
        %609 = vmatprep.subr.mxu0 0.0
        %610 = vmatpush1.msra.mxu0 0.0
        %611 = vmatprep.subr.mxu0 0.0
        %612 = vmatpush1.msra.mxu0 0.0
        %613 = vmatprep.subr.mxu0 0.0
        %614 = vmatpush1.msra.mxu0 0.0
        %615 = vmatprep.subr.mxu0 0.0
        %616 = vmatpush1.msra.mxu0 0.0
        %617 = vmatprep.subr.mxu0 0.0
        %618 = vmatpush1.msra.mxu0 0.0
        %619 = vmatprep.subr.mxu0 0.0
        %620 = vmatpush1.msra.mxu0 0.0
        %621 = vmatprep.subr.mxu0 0.0
        %622 = vmatpush1.msra.mxu0 0.0
        %623 = vmatprep.subr.mxu0 0.0
        %624 = vmatpush1.msra.mxu0 0.0
        %625 = vmatprep.subr.mxu0 0.0
        %626 = vmatpush1.msra.mxu0 0.0
        %627 = vmatprep.subr.mxu0 0.0
        %628 = vmatpush1.msra.mxu0 0.0
        %629 = vmatprep.subr.mxu0 0.0
        %630 = vmatpush1.msra.mxu0 0.0
        %631 = vmatprep.subr.mxu0 0.0
        %632 = vmatpush1.msra.mxu0 0.0
        %633 = vmatprep.subr.mxu0 0.0
        %634 = vmatpush1.msra.mxu0 0.0
        %635 = vmatprep.subr.mxu0 0.0
        %636 = vmatpush1.msra.mxu0 0.0
        %637 = vmatprep.subr.mxu0 %v351
        %638 = vmatpush1.msra.mxu0 %v350
        %639 = vmatprep.subr.mxu0 0.0
        %640 = vmatpush2.msra.mxu0 0.0
        %641 = vmatprep.subr.mxu0 0.0
        %642 = vmatpush2.msra.mxu0 0.0
        %643 = vmatprep.subr.mxu0 0.0
        %644 = vmatpush2.msra.mxu0 0.0
        %645 = vmatprep.subr.mxu0 0.0
        %646 = vmatpush2.msra.mxu0 0.0
        %647 = vmatprep.subr.mxu0 0.0
        %648 = vmatpush2.msra.mxu0 0.0
        %649 = vmatprep.subr.mxu0 0.0
        %650 = vmatpush2.msra.mxu0 0.0
        %651 = vmatprep.subr.mxu0 0.0
        %652 = vmatpush2.msra.mxu0 0.0
        %653 = vmatprep.subr.mxu0 0.0
        %654 = vmatpush2.msra.mxu0 0.0
        %655 = vmatprep.subr.mxu0 0.0
        %656 = vmatpush2.msra.mxu0 0.0
        %657 = vmatprep.subr.mxu0 0.0
        %658 = vmatpush2.msra.mxu0 0.0
        %659 = vmatprep.subr.mxu0 0.0
        %660 = vmatpush2.msra.mxu0 0.0
        %661 = vmatprep.subr.mxu0 0.0
        %662 = vmatpush2.msra.mxu0 0.0
        %663 = vmatprep.subr.mxu0 0.0
        %664 = vmatpush2.msra.mxu0 0.0
        %665 = vmatprep.subr.mxu0 0.0
        %666 = vmatpush2.msra.mxu0 0.0
        %667 = vmatprep.subr.mxu0 0.0
        %668 = vmatpush2.msra.mxu0 0.0
        %669 = vmatprep.subr.mxu0 0.0
        %670 = vmatpush2.msra.mxu0 0.0
        %671 = vmatprep.mubr.f32.mxu0 0.0
        %672 = vmatmul.mubr.f32.gmra.mxu0 %v605
        %v673 = vpop.f32.mrf.mxu0
        %v674 = vadd.f32 0.0, %v673
        %v675 = vpop.f32.mrf.mxu0
        %v676 = vadd.f32 0.0, %v675
        %677 = vdwg.mxu0
        %v679 = vsel %vm603, %v602, 0
        %681 = vmatprep.subr.mxu0 0.0
        %682 = vmatpush1.msra.mxu0 0.0
        %683 = vmatprep.subr.mxu0 0.0
        %684 = vmatpush1.msra.mxu0 0.0
        %685 = vmatprep.subr.mxu0 0.0
        %686 = vmatpush1.msra.mxu0 0.0
        %687 = vmatprep.subr.mxu0 0.0
        %688 = vmatpush1.msra.mxu0 0.0
        %689 = vmatprep.subr.mxu0 0.0
        %690 = vmatpush1.msra.mxu0 0.0
        %691 = vmatprep.subr.mxu0 0.0
        %692 = vmatpush1.msra.mxu0 0.0
        %693 = vmatprep.subr.mxu0 0.0
        %694 = vmatpush1.msra.mxu0 0.0
        %695 = vmatprep.subr.mxu0 0.0
        %696 = vmatpush1.msra.mxu0 0.0
        %697 = vmatprep.subr.mxu0 0.0
        %698 = vmatpush1.msra.mxu0 0.0
        %699 = vmatprep.subr.mxu0 0.0
        %700 = vmatpush1.msra.mxu0 0.0
        %701 = vmatprep.subr.mxu0 0.0
        %702 = vmatpush1.msra.mxu0 0.0
        %703 = vmatprep.subr.mxu0 0.0
        %704 = vmatpush1.msra.mxu0 0.0
        %705 = vmatprep.subr.mxu0 0.0
        %706 = vmatpush1.msra.mxu0 0.0
        %707 = vmatprep.subr.mxu0 0.0
        %708 = vmatpush1.msra.mxu0 0.0
        %709 = vmatprep.subr.mxu0 0.0
        %710 = vmatpush1.msra.mxu0 0.0
        %711 = vmatprep.subr.mxu0 %v351
        %712 = vmatpush1.msra.mxu0 %v350
        %713 = vmatprep.subr.mxu0 0.0
        %714 = vmatpush2.msra.mxu0 0.0
        %715 = vmatprep.subr.mxu0 0.0
        %716 = vmatpush2.msra.mxu0 0.0
        %717 = vmatprep.subr.mxu0 0.0
        %718 = vmatpush2.msra.mxu0 0.0
        %719 = vmatprep.subr.mxu0 0.0
        %720 = vmatpush2.msra.mxu0 0.0
        %721 = vmatprep.subr.mxu0 0.0
        %722 = vmatpush2.msra.mxu0 0.0
        %723 = vmatprep.subr.mxu0 0.0
        %724 = vmatpush2.msra.mxu0 0.0
        %725 = vmatprep.subr.mxu0 0.0
        %726 = vmatpush2.msra.mxu0 0.0
        %727 = vmatprep.subr.mxu0 0.0
        %728 = vmatpush2.msra.mxu0 0.0
        %729 = vmatprep.subr.mxu0 0.0
        %730 = vmatpush2.msra.mxu0 0.0
        %731 = vmatprep.subr.mxu0 0.0
        %732 = vmatpush2.msra.mxu0 0.0
        %733 = vmatprep.subr.mxu0 0.0
        %734 = vmatpush2.msra.mxu0 0.0
        %735 = vmatprep.subr.mxu0 0.0
        %736 = vmatpush2.msra.mxu0 0.0
        %737 = vmatprep.subr.mxu0 0.0
        %738 = vmatpush2.msra.mxu0 0.0
        %739 = vmatprep.subr.mxu0 0.0
        %740 = vmatpush2.msra.mxu0 0.0
        %741 = vmatprep.subr.mxu0 0.0
        %742 = vmatpush2.msra.mxu0 0.0
        %743 = vmatprep.subr.mxu0 0.0
        %744 = vmatpush2.msra.mxu0 0.0
        %745 = vmatprep.mubr.f32.mxu0 0.0
        %746 = vmatmul.mubr.f32.gmra.mxu0 %v679
        %v747 = vpop.f32.mrf.mxu0
        %v748 = vadd.f32 0.0, %v747
        %v749 = vpop.f32.mrf.mxu0
        %v750 = vadd.f32 0.0, %v749
        %751 = vdwg.mxu0
        %v752 = vsub.f32 %v450, %v674
        %v753 = vsub.f32 %v452, %v676
        %v754 = vmul.f32 %v752, %v748
        %v755 = vmul.f32 %v753, %v750
        %v756 = vld [vmem:[%s2] sm:$0x3]
        %v758 = vlaneseq
        %v759 = vshrl.u32 %v758, 7
        %v760 = vsub.s32 0, %v759
        %v761 = vrot.slane %v756, %v760
        %v762 = vlaneseq
        %v763 = vshrl.u32 %v762, 7
        %v764 = vsub.s32 1, %v763
        %v765 = vrot.slane %v756, %v764
        %v768 = vmul.f32 %v754, %v761
        %v769 = vmul.f32 %v755, %v765
        %v770 = vld [vmem:[#allocation4] sm:$0x3]
        %v772 = vlaneseq
        %v773 = vshrl.u32 %v772, 7
        %v774 = vsub.s32 0, %v773
        %v775 = vrot.slane %v770, %v774
        %v776 = vlaneseq
        %v777 = vshrl.u32 %v776, 7
        %v778 = vsub.s32 1, %v777
        %v779 = vrot.slane %v770, %v778
        %v782 = vadd.f32 %v768, %v775
        %v783 = vadd.f32 %v769, %v779
        %v784 = vadd.f32 %v782, %v783
        %v785 = vxor.u32 %v784, 2147483648
        %v786 = vmul.f32 %v785, 1.442695
        %v787 = vpow.pop %v786
        %v788 = vadd.f32 %v787, 1.0
        %v789 = vrcp.pop %v788
        %v790 = vmul.f32 1.0, %v789
        %792 = vrot.lane.b32.xlu0 %v783, 96
        %v793 = vpop.permute.xlu0 %792
        %v795 = vmul.f32 %v790, %v793
        %797 = vrot.lane.b32.xlu0 %v795, 32
        %v798 = vpop.permute.xlu0 %797
        %v800 = vadd.f32 %v782, %v798
        %v801 = vtanh.pop %v800
        %v802 = vsub.f32 1.0, %v790
        %v803 = vmul.f32 %v802, %v352
        %805 = vrot.lane.b32.xlu0 %v801, 64
        %v806 = vpop.permute.xlu0 %805
        %v808 = vmul.f32 %v790, %v806
        %v809 = vadd.f32 %v803, %v808
        %vm810 = vcmask 261120
        %811 = vst.msk [vmem:[#allocation2] sm:$0xff] %vm810, %v809
        %812 = vst.msk [vmem:[%s297] sm:$0xff] %vm810, %v809
        %v813 = vpack.c.bf16 %v809, %v809
        %814 = vst.msk [vmem:[#allocation3] sm:$0xf] %vm316, %v813
        %s815 = scalar_lea.vmem [#allocation2], 8
        %v816 = vld [vmem:[%s815] sm:$0xff]
        %v817 = vpack.c.bf16 %v816, %v816
        %v819 = vunpack.c.l.b16 %v817
        %v820 = vpack.c.b16 %v819, %v819
        %821 = vrot.lane.b32.xlu0 %v820, 32
        %v822 = vpop.permute.xlu0 %821
        %824 = vst.msk [vmem:[#allocation3] sm:$0xf] %vm360, %v822
        %v825 = vld [vmem:[#allocation3] sm:$0xf]
        %s826 = scalar_lea.vmem %s1, 64
        %v827 = vld [vmem:[%s826] sm:$0xff]
        %v828 = vld [vmem:[%s826 + $0x8] sm:$0xff]
        %v829 = vld [vmem:[%s826 + $0x10] sm:$0xff]
        %v830 = vld [vmem:[%s826 + $0x18] sm:$0xff]
        %v831 = vld [vmem:[%s826 + $0x20] sm:$0xff]
        %v832 = vld [vmem:[%s826 + $0x28] sm:$0xff]
        %v833 = vld [vmem:[%s826 + $0x30] sm:$0xff]
        %v834 = vld [vmem:[%s826 + $0x38] sm:$0xff]
        %v843 = vunpack.c.l.b16 %v827
        %v844 = vunpack.c.h.b16 %v827
        %v845 = vunpack.c.l.b16 %v828
        %v846 = vunpack.c.h.b16 %v828
        %v847 = vunpack.c.l.b16 %v829
        %v848 = vunpack.c.h.b16 %v829
        %v849 = vunpack.c.l.b16 %v830
        %v850 = vunpack.c.h.b16 %v830
        %v851 = vunpack.c.l.b16 %v831
        %v852 = vunpack.c.h.b16 %v831
        %v853 = vunpack.c.l.b16 %v832
        %v854 = vunpack.c.h.b16 %v832
        %v855 = vunpack.c.l.b16 %v833
        %v856 = vunpack.c.h.b16 %v833
        %v857 = vunpack.c.l.b16 %v834
        %v858 = vunpack.c.h.b16 %v834
        %v859 = vpack.c.b16 %v845, %v843
        %v860 = vpack.c.b16 %v846, %v844
        %v861 = vpack.c.b16 %v849, %v847
        %v862 = vpack.c.b16 %v850, %v848
        %v863 = vpack.c.b16 %v853, %v851
        %v864 = vpack.c.b16 %v854, %v852
        %v865 = vpack.c.b16 %v857, %v855
        %v866 = vpack.c.b16 %v858, %v856
        %v876 = vsel %vm411, %v825, 0
        %878 = vmatprep.subr.bf16.mxu0 0
        %879 = vmatpush1.bf16.msra.mxu0 0
        %880 = vmatprep.subr.bf16.mxu0 0
        %881 = vmatpush1.bf16.msra.mxu0 0
        %882 = vmatprep.subr.bf16.mxu0 0
        %883 = vmatpush1.bf16.msra.mxu0 0
        %884 = vmatprep.subr.bf16.mxu0 0
        %885 = vmatpush1.bf16.msra.mxu0 0
        %886 = vmatprep.subr.bf16.mxu0 %v866
        %887 = vmatpush1.bf16.msra.mxu0 %v865
        %888 = vmatprep.subr.bf16.mxu0 %v864
        %889 = vmatpush1.bf16.msra.mxu0 %v863
        %890 = vmatprep.subr.bf16.mxu0 %v862
        %891 = vmatpush1.bf16.msra.mxu0 %v861
        %892 = vmatprep.subr.bf16.mxu0 %v860
        %893 = vmatpush1.bf16.msra.mxu0 %v859
        %894 = vmatprep.subr.bf16.mxu0 0
        %895 = vmatpush2.bf16.msra.mxu0 0
        %896 = vmatprep.subr.bf16.mxu0 0
        %897 = vmatpush2.bf16.msra.mxu0 0
        %898 = vmatprep.subr.bf16.mxu0 0
        %899 = vmatpush2.bf16.msra.mxu0 0
        %900 = vmatprep.subr.bf16.mxu0 0
        %901 = vmatpush2.bf16.msra.mxu0 0
        %902 = vmatprep.subr.bf16.mxu0 0
        %903 = vmatpush2.bf16.msra.mxu0 0
        %904 = vmatprep.subr.bf16.mxu0 0
        %905 = vmatpush2.bf16.msra.mxu0 0
        %906 = vmatprep.subr.bf16.mxu0 0
        %907 = vmatpush2.bf16.msra.mxu0 0
        %908 = vmatprep.subr.bf16.mxu0 0
        %909 = vmatpush2.bf16.msra.mxu0 0
        %910 = vmatprep.mubr.bf16.mxu0 0
        %911 = vmatmul.mubr.bf16.gmra.mxu0 %v876
        %v912 = vpop.f32.mrf.mxu0
        %v913 = vadd.f32 0.0, %v912
        %v914 = vpop.f32.mrf.mxu0
        %v915 = vadd.f32 0.0, %v914
        %v916 = vpop.f32.mrf.mxu0
        %v917 = vpop.f32.mrf.mxu0
        %918 = vdwg.mxu0
        %919 = vmatprep.subr.mxu0 0.0
        %920 = vmatpush1.msra.mxu0 %v333
        %921 = vmatprep.subr.mxu0 0.0
        %922 = vmatpush1.msra.mxu0 %v332
        %923 = vmatprep.subr.mxu0 0.0
        %924 = vmatpush1.msra.mxu0 %v331
        %925 = vmatprep.subr.mxu0 0.0
        %926 = vmatpush1.msra.mxu0 %v330
        %927 = vmatprep.subr.mxu0 0.0
        %928 = vmatpush1.msra.mxu0 %v329
        %929 = vmatprep.subr.mxu0 0.0
        %930 = vmatpush1.msra.mxu0 %v328
        %931 = vmatprep.subr.mxu0 0.0
        %932 = vmatpush1.msra.mxu0 %v327
        %933 = vmatprep.subr.mxu0 0.0
        %934 = vmatpush1.msra.mxu0 %v326
        %935 = vmatprep.subr.mxu0 0.0
        %936 = vmatpush1.msra.mxu0 %v325
        %937 = vmatprep.subr.mxu0 0.0
        %938 = vmatpush1.msra.mxu0 %v324
        %939 = vmatprep.subr.mxu0 0.0
        %940 = vmatpush1.msra.mxu0 %v323
        %941 = vmatprep.subr.mxu0 0.0
        %942 = vmatpush1.msra.mxu0 %v322
        %943 = vmatprep.subr.mxu0 0.0
        %944 = vmatpush1.msra.mxu0 %v321
        %945 = vmatprep.subr.mxu0 0.0
        %946 = vmatpush1.msra.mxu0 %v320
        %947 = vmatprep.subr.mxu0 0.0
        %948 = vmatpush1.msra.mxu0 %v319
        %949 = vmatprep.subr.mxu0 0.0
        %950 = vmatpush1.msra.mxu0 %v318
        %951 = vmatprep.subr.mxu0 0.0
        %952 = vmatpush2.msra.mxu0 %v349
        %953 = vmatprep.subr.mxu0 0.0
        %954 = vmatpush2.msra.mxu0 %v348
        %955 = vmatprep.subr.mxu0 0.0
        %956 = vmatpush2.msra.mxu0 %v347
        %957 = vmatprep.subr.mxu0 0.0
        %958 = vmatpush2.msra.mxu0 %v346
        %959 = vmatprep.subr.mxu0 0.0
        %960 = vmatpush2.msra.mxu0 %v345
        %961 = vmatprep.subr.mxu0 0.0
        %962 = vmatpush2.msra.mxu0 %v344
        %963 = vmatprep.subr.mxu0 0.0
        %964 = vmatpush2.msra.mxu0 %v343
        %965 = vmatprep.subr.mxu0 0.0
        %966 = vmatpush2.msra.mxu0 %v342
        %967 = vmatprep.subr.mxu0 0.0
        %968 = vmatpush2.msra.mxu0 %v341
        %969 = vmatprep.subr.mxu0 0.0
        %970 = vmatpush2.msra.mxu0 %v340
        %971 = vmatprep.subr.mxu0 0.0
        %972 = vmatpush2.msra.mxu0 %v339
        %973 = vmatprep.subr.mxu0 0.0
        %974 = vmatpush2.msra.mxu0 %v338
        %975 = vmatprep.subr.mxu0 0.0
        %976 = vmatpush2.msra.mxu0 %v337
        %977 = vmatprep.subr.mxu0 0.0
        %978 = vmatpush2.msra.mxu0 %v336
        %979 = vmatprep.subr.mxu0 0.0
        %980 = vmatpush2.msra.mxu0 %v335
        %981 = vmatprep.subr.mxu0 0.0
        %982 = vmatpush2.msra.mxu0 %v334
        %983 = vmatprep.mubr.f32.mxu0 %v915
        %984 = vmatmul.mubr.f32.gmra.mxu0 %v913
        %v985 = vpop.f32.mrf.mxu0
        %v986 = vadd.f32 0.0, %v985
        %v987 = vpop.f32.mrf.mxu0
        %988 = vdwg.mxu0
        %v989 = vmul.f32 %v913, %v913
        %v990 = vmul.f32 %v915, %v915
        %991 = vmatprep.subr.mxu0 0.0
        %992 = vmatpush1.msra.mxu0 %v333
        %993 = vmatprep.subr.mxu0 0.0
        %994 = vmatpush1.msra.mxu0 %v332
        %995 = vmatprep.subr.mxu0 0.0
        %996 = vmatpush1.msra.mxu0 %v331
        %997 = vmatprep.subr.mxu0 0.0
        %998 = vmatpush1.msra.mxu0 %v330
        %999 = vmatprep.subr.mxu0 0.0
        %1000 = vmatpush1.msra.mxu0 %v329
        %1001 = vmatprep.subr.mxu0 0.0
        %1002 = vmatpush1.msra.mxu0 %v328
        %1003 = vmatprep.subr.mxu0 0.0
        %1004 = vmatpush1.msra.mxu0 %v327
        %1005 = vmatprep.subr.mxu0 0.0
        %1006 = vmatpush1.msra.mxu0 %v326
        %1007 = vmatprep.subr.mxu0 0.0
        %1008 = vmatpush1.msra.mxu0 %v325
        %1009 = vmatprep.subr.mxu0 0.0
        %1010 = vmatpush1.msra.mxu0 %v324
        %1011 = vmatprep.subr.mxu0 0.0
        %1012 = vmatpush1.msra.mxu0 %v323
        %1013 = vmatprep.subr.mxu0 0.0
        %1014 = vmatpush1.msra.mxu0 %v322
        %1015 = vmatprep.subr.mxu0 0.0
        %1016 = vmatpush1.msra.mxu0 %v321
        %1017 = vmatprep.subr.mxu0 0.0
        %1018 = vmatpush1.msra.mxu0 %v320
        %1019 = vmatprep.subr.mxu0 0.0
        %1020 = vmatpush1.msra.mxu0 %v319
        %1021 = vmatprep.subr.mxu0 0.0
        %1022 = vmatpush1.msra.mxu0 %v318
        %1023 = vmatprep.subr.mxu0 0.0
        %1024 = vmatpush2.msra.mxu0 %v349
        %1025 = vmatprep.subr.mxu0 0.0
        %1026 = vmatpush2.msra.mxu0 %v348
        %1027 = vmatprep.subr.mxu0 0.0
        %1028 = vmatpush2.msra.mxu0 %v347
        %1029 = vmatprep.subr.mxu0 0.0
        %1030 = vmatpush2.msra.mxu0 %v346
        %1031 = vmatprep.subr.mxu0 0.0
        %1032 = vmatpush2.msra.mxu0 %v345
        %1033 = vmatprep.subr.mxu0 0.0
        %1034 = vmatpush2.msra.mxu0 %v344
        %1035 = vmatprep.subr.mxu0 0.0
        %1036 = vmatpush2.msra.mxu0 %v343
        %1037 = vmatprep.subr.mxu0 0.0
        %1038 = vmatpush2.msra.mxu0 %v342
        %1039 = vmatprep.subr.mxu0 0.0
        %1040 = vmatpush2.msra.mxu0 %v341
        %1041 = vmatprep.subr.mxu0 0.0
        %1042 = vmatpush2.msra.mxu0 %v340
        %1043 = vmatprep.subr.mxu0 0.0
        %1044 = vmatpush2.msra.mxu0 %v339
        %1045 = vmatprep.subr.mxu0 0.0
        %1046 = vmatpush2.msra.mxu0 %v338
        %1047 = vmatprep.subr.mxu0 0.0
        %1048 = vmatpush2.msra.mxu0 %v337
        %1049 = vmatprep.subr.mxu0 0.0
        %1050 = vmatpush2.msra.mxu0 %v336
        %1051 = vmatprep.subr.mxu0 0.0
        %1052 = vmatpush2.msra.mxu0 %v335
        %1053 = vmatprep.subr.mxu0 0.0
        %1054 = vmatpush2.msra.mxu0 %v334
        %1055 = vmatprep.mubr.f32.mxu0 %v990
        %1056 = vmatmul.mubr.f32.gmra.mxu0 %v989
        %v1057 = vpop.f32.mrf.mxu0
        %v1058 = vadd.f32 0.0, %v1057
        %v1059 = vpop.f32.mrf.mxu0
        %1060 = vdwg.mxu0
        %v1061 = vmul.f32 %v986, %v986
        %v1062 = vsub.f32 %v1058, %v1061
        %v1063 = vmax.f32 %v1062, 0.0
        %v1064 = vadd.f32 %v1063, 1e-05
        %v1065 = vrsqrt.pop %v1064
        %v1067 = vsel %vm603, %v986, 0
        %1069 = vmatprep.subr.mxu0 0.0
        %1070 = vmatpush1.msra.mxu0 0.0
        %1071 = vmatprep.subr.mxu0 0.0
        %1072 = vmatpush1.msra.mxu0 0.0
        %1073 = vmatprep.subr.mxu0 0.0
        %1074 = vmatpush1.msra.mxu0 0.0
        %1075 = vmatprep.subr.mxu0 0.0
        %1076 = vmatpush1.msra.mxu0 0.0
        %1077 = vmatprep.subr.mxu0 0.0
        %1078 = vmatpush1.msra.mxu0 0.0
        %1079 = vmatprep.subr.mxu0 0.0
        %1080 = vmatpush1.msra.mxu0 0.0
        %1081 = vmatprep.subr.mxu0 0.0
        %1082 = vmatpush1.msra.mxu0 0.0
        %1083 = vmatprep.subr.mxu0 0.0
        %1084 = vmatpush1.msra.mxu0 0.0
        %1085 = vmatprep.subr.mxu0 0.0
        %1086 = vmatpush1.msra.mxu0 0.0
        %1087 = vmatprep.subr.mxu0 0.0
        %1088 = vmatpush1.msra.mxu0 0.0
        %1089 = vmatprep.subr.mxu0 0.0
        %1090 = vmatpush1.msra.mxu0 0.0
        %1091 = vmatprep.subr.mxu0 0.0
        %1092 = vmatpush1.msra.mxu0 0.0
        %1093 = vmatprep.subr.mxu0 0.0
        %1094 = vmatpush1.msra.mxu0 0.0
        %1095 = vmatprep.subr.mxu0 0.0
        %1096 = vmatpush1.msra.mxu0 0.0
        %1097 = vmatprep.subr.mxu0 0.0
        %1098 = vmatpush1.msra.mxu0 0.0
        %1099 = vmatprep.subr.mxu0 %v351
        %1100 = vmatpush1.msra.mxu0 %v350
        %1101 = vmatprep.subr.mxu0 0.0
        %1102 = vmatpush2.msra.mxu0 0.0
        %1103 = vmatprep.subr.mxu0 0.0
        %1104 = vmatpush2.msra.mxu0 0.0
        %1105 = vmatprep.subr.mxu0 0.0
        %1106 = vmatpush2.msra.mxu0 0.0
        %1107 = vmatprep.subr.mxu0 0.0
        %1108 = vmatpush2.msra.mxu0 0.0
        %1109 = vmatprep.subr.mxu0 0.0
        %1110 = vmatpush2.msra.mxu0 0.0
        %1111 = vmatprep.subr.mxu0 0.0
        %1112 = vmatpush2.msra.mxu0 0.0
        %1113 = vmatprep.subr.mxu0 0.0
        %1114 = vmatpush2.msra.mxu0 0.0
        %1115 = vmatprep.subr.mxu0 0.0
        %1116 = vmatpush2.msra.mxu0 0.0
        %1117 = vmatprep.subr.mxu0 0.0
        %1118 = vmatpush2.msra.mxu0 0.0
        %1119 = vmatprep.subr.mxu0 0.0
        %1120 = vmatpush2.msra.mxu0 0.0
        %1121 = vmatprep.subr.mxu0 0.0
        %1122 = vmatpush2.msra.mxu0 0.0
        %1123 = vmatprep.subr.mxu0 0.0
        %1124 = vmatpush2.msra.mxu0 0.0
        %1125 = vmatprep.subr.mxu0 0.0
        %1126 = vmatpush2.msra.mxu0 0.0
        %1127 = vmatprep.subr.mxu0 0.0
        %1128 = vmatpush2.msra.mxu0 0.0
        %1129 = vmatprep.subr.mxu0 0.0
        %1130 = vmatpush2.msra.mxu0 0.0
        %1131 = vmatprep.subr.mxu0 0.0
        %1132 = vmatpush2.msra.mxu0 0.0
        %1133 = vmatprep.mubr.f32.mxu0 0.0
        %1134 = vmatmul.mubr.f32.gmra.mxu0 %v1067
        %v1135 = vpop.f32.mrf.mxu0
        %v1136 = vadd.f32 0.0, %v1135
        %v1137 = vpop.f32.mrf.mxu0
        %v1138 = vadd.f32 0.0, %v1137
        %1139 = vdwg.mxu0
        %v1141 = vsel %vm603, %v1065, 0
        %1143 = vmatprep.subr.mxu0 0.0
        %1144 = vmatpush1.msra.mxu0 0.0
        %1145 = vmatprep.subr.mxu0 0.0
        %1146 = vmatpush1.msra.mxu0 0.0
        %1147 = vmatprep.subr.mxu0 0.0
        %1148 = vmatpush1.msra.mxu0 0.0
        %1149 = vmatprep.subr.mxu0 0.0
        %1150 = vmatpush1.msra.mxu0 0.0
        %1151 = vmatprep.subr.mxu0 0.0
        %1152 = vmatpush1.msra.mxu0 0.0
        %1153 = vmatprep.subr.mxu0 0.0
        %1154 = vmatpush1.msra.mxu0 0.0
        %1155 = vmatprep.subr.mxu0 0.0
        %1156 = vmatpush1.msra.mxu0 0.0
        %1157 = vmatprep.subr.mxu0 0.0
        %1158 = vmatpush1.msra.mxu0 0.0
        %1159 = vmatprep.subr.mxu0 0.0
        %1160 = vmatpush1.msra.mxu0 0.0
        %1161 = vmatprep.subr.mxu0 0.0
        %1162 = vmatpush1.msra.mxu0 0.0
        %1163 = vmatprep.subr.mxu0 0.0
        %1164 = vmatpush1.msra.mxu0 0.0
        %1165 = vmatprep.subr.mxu0 0.0
        %1166 = vmatpush1.msra.mxu0 0.0
        %1167 = vmatprep.subr.mxu0 0.0
        %1168 = vmatpush1.msra.mxu0 0.0
        %1169 = vmatprep.subr.mxu0 0.0
        %1170 = vmatpush1.msra.mxu0 0.0
        %1171 = vmatprep.subr.mxu0 0.0
        %1172 = vmatpush1.msra.mxu0 0.0
        %1173 = vmatprep.subr.mxu0 %v351
        %1174 = vmatpush1.msra.mxu0 %v350
        %1175 = vmatprep.subr.mxu0 0.0
        %1176 = vmatpush2.msra.mxu0 0.0
        %1177 = vmatprep.subr.mxu0 0.0
        %1178 = vmatpush2.msra.mxu0 0.0
        %1179 = vmatprep.subr.mxu0 0.0
        %1180 = vmatpush2.msra.mxu0 0.0
        %1181 = vmatprep.subr.mxu0 0.0
        %1182 = vmatpush2.msra.mxu0 0.0
        %1183 = vmatprep.subr.mxu0 0.0
        %1184 = vmatpush2.msra.mxu0 0.0
        %1185 = vmatprep.subr.mxu0 0.0
        %1186 = vmatpush2.msra.mxu0 0.0
        %1187 = vmatprep.subr.mxu0 0.0
        %1188 = vmatpush2.msra.mxu0 0.0
        %1189 = vmatprep.subr.mxu0 0.0
        %1190 = vmatpush2.msra.mxu0 0.0
        %1191 = vmatprep.subr.mxu0 0.0
        %1192 = vmatpush2.msra.mxu0 0.0
        %1193 = vmatprep.subr.mxu0 0.0
        %1194 = vmatpush2.msra.mxu0 0.0
        %1195 = vmatprep.subr.mxu0 0.0
        %1196 = vmatpush2.msra.mxu0 0.0
        %1197 = vmatprep.subr.mxu0 0.0
        %1198 = vmatpush2.msra.mxu0 0.0
        %1199 = vmatprep.subr.mxu0 0.0
        %1200 = vmatpush2.msra.mxu0 0.0
        %1201 = vmatprep.subr.mxu0 0.0
        %1202 = vmatpush2.msra.mxu0 0.0
        %1203 = vmatprep.subr.mxu0 0.0
        %1204 = vmatpush2.msra.mxu0 0.0
        %1205 = vmatprep.subr.mxu0 0.0
        %1206 = vmatpush2.msra.mxu0 0.0
        %1207 = vmatprep.mubr.f32.mxu0 0.0
        %1208 = vmatmul.mubr.f32.gmra.mxu0 %v1141
        %v1209 = vpop.f32.mrf.mxu0
        %v1210 = vadd.f32 0.0, %v1209
        %v1211 = vpop.f32.mrf.mxu0
        %v1212 = vadd.f32 0.0, %v1211
        %1213 = vdwg.mxu0
        %v1214 = vsub.f32 %v913, %v1136
        %v1215 = vsub.f32 %v915, %v1138
        %v1216 = vmul.f32 %v1214, %v1210
        %v1217 = vmul.f32 %v1215, %v1212
        %s1218 = scalar_lea.vmem %s2, 2
        %v1219 = vld [vmem:[%s1218] sm:$0x3]
        %v1221 = vlaneseq
        %v1222 = vshrl.u32 %v1221, 7
        %v1223 = vsub.s32 0, %v1222
        %v1224 = vrot.slane %v1219, %v1223
        %v1225 = vlaneseq
        %v1226 = vshrl.u32 %v1225, 7
        %v1227 = vsub.s32 1, %v1226
        %v1228 = vrot.slane %v1219, %v1227
        %v1231 = vmul.f32 %v1216, %v1224
        %v1232 = vmul.f32 %v1217, %v1228
        %s1233 = scalar_lea.vmem [#allocation4], 2
        %v1234 = vld [vmem:[%s1233] sm:$0x3]
        %v1236 = vlaneseq
        %v1237 = vshrl.u32 %v1236, 7
        %v1238 = vsub.s32 0, %v1237
        %v1239 = vrot.slane %v1234, %v1238
        %v1240 = vlaneseq
        %v1241 = vshrl.u32 %v1240, 7
        %v1242 = vsub.s32 1, %v1241
        %v1243 = vrot.slane %v1234, %v1242
        %v1246 = vadd.f32 %v1231, %v1239
        %v1247 = vadd.f32 %v1232, %v1243
        %v1248 = vadd.f32 %v1246, %v1247
        %v1249 = vxor.u32 %v1248, 2147483648
        %v1250 = vmul.f32 %v1249, 1.442695
        %v1251 = vpow.pop %v1250
        %v1252 = vadd.f32 %v1251, 1.0
        %v1253 = vrcp.pop %v1252
        %v1254 = vmul.f32 1.0, %v1253
        %1256 = vrot.lane.b32.xlu0 %v1247, 96
        %v1257 = vpop.permute.xlu0 %1256
        %v1259 = vmul.f32 %v1254, %v1257
        %1261 = vrot.lane.b32.xlu0 %v1259, 32
        %v1262 = vpop.permute.xlu0 %1261
        %v1264 = vadd.f32 %v1246, %v1262
        %v1265 = vtanh.pop %v1264
        %v1266 = vsub.f32 1.0, %v1254
        %v1267 = vmul.f32 %v1266, %v816
        %1269 = vrot.lane.b32.xlu0 %v1265, 64
        %v1270 = vpop.permute.xlu0 %1269
        %v1272 = vmul.f32 %v1254, %v1270
        %v1273 = vadd.f32 %v1267, %v1272
        %1274 = vst.msk [vmem:[%s815] sm:$0xff] %vm810, %v1273
        %s1275 = scalar_lea.vmem %s297, 8 [#allocation9]
        %1276 = vst.msk [vmem:[%s1275] sm:$0xff] %vm810, %v1273
        %v1277 = vpack.c.bf16 %v1273, %v1273
        %1278 = vst.msk [vmem:[#allocation3] sm:$0xf] %vm316, %v1277
        %s1279 = scalar_lea.vmem [#allocation2], 16
        %v1280 = vld [vmem:[%s1279] sm:$0xff]
        %v1281 = vpack.c.bf16 %v1280, %v1280
        %v1283 = vunpack.c.l.b16 %v1281
        %v1284 = vpack.c.b16 %v1283, %v1283
        %1285 = vrot.lane.b32.xlu0 %v1284, 32
        %v1286 = vpop.permute.xlu0 %1285
        %1288 = vst.msk [vmem:[#allocation3] sm:$0xf] %vm360, %v1286
        %v1289 = vld [vmem:[#allocation3] sm:$0xf]
        %s1290 = scalar_lea.vmem %s1, 128
        %v1291 = vld [vmem:[%s1290] sm:$0xff]
        %v1292 = vld [vmem:[%s1290 + $0x8] sm:$0xff]
        %v1293 = vld [vmem:[%s1290 + $0x10] sm:$0xff]
        %v1294 = vld [vmem:[%s1290 + $0x18] sm:$0xff]
        %v1295 = vld [vmem:[%s1290 + $0x20] sm:$0xff]
        %v1296 = vld [vmem:[%s1290 + $0x28] sm:$0xff]
        %v1297 = vld [vmem:[%s1290 + $0x30] sm:$0xff]
        %v1298 = vld [vmem:[%s1290 + $0x38] sm:$0xff]
        %v1307 = vunpack.c.l.b16 %v1291
        %v1308 = vunpack.c.h.b16 %v1291
        %v1309 = vunpack.c.l.b16 %v1292
        %v1310 = vunpack.c.h.b16 %v1292
        %v1311 = vunpack.c.l.b16 %v1293
        %v1312 = vunpack.c.h.b16 %v1293
        %v1313 = vunpack.c.l.b16 %v1294
        %v1314 = vunpack.c.h.b16 %v1294
        %v1315 = vunpack.c.l.b16 %v1295
        %v1316 = vunpack.c.h.b16 %v1295
        %v1317 = vunpack.c.l.b16 %v1296
        %v1318 = vunpack.c.h.b16 %v1296
        %v1319 = vunpack.c.l.b16 %v1297
        %v1320 = vunpack.c.h.b16 %v1297
        %v1321 = vunpack.c.l.b16 %v1298
        %v1322 = vunpack.c.h.b16 %v1298
        %v1323 = vpack.c.b16 %v1309, %v1307
        %v1324 = vpack.c.b16 %v1310, %v1308
        %v1325 = vpack.c.b16 %v1313, %v1311
        %v1326 = vpack.c.b16 %v1314, %v1312
        %v1327 = vpack.c.b16 %v1317, %v1315
        %v1328 = vpack.c.b16 %v1318, %v1316
        %v1329 = vpack.c.b16 %v1321, %v1319
        %v1330 = vpack.c.b16 %v1322, %v1320
        %v1340 = vsel %vm411, %v1289, 0
        %1342 = vmatprep.subr.bf16.mxu0 0
        %1343 = vmatpush1.bf16.msra.mxu0 0
        %1344 = vmatprep.subr.bf16.mxu0 0
        %1345 = vmatpush1.bf16.msra.mxu0 0
        %1346 = vmatprep.subr.bf16.mxu0 0
        %1347 = vmatpush1.bf16.msra.mxu0 0
        %1348 = vmatprep.subr.bf16.mxu0 0
        %1349 = vmatpush1.bf16.msra.mxu0 0
        %1350 = vmatprep.subr.bf16.mxu0 %v1330
        %1351 = vmatpush1.bf16.msra.mxu0 %v1329
        %1352 = vmatprep.subr.bf16.mxu0 %v1328
        %1353 = vmatpush1.bf16.msra.mxu0 %v1327
        %1354 = vmatprep.subr.bf16.mxu0 %v1326
        %1355 = vmatpush1.bf16.msra.mxu0 %v1325
        %1356 = vmatprep.subr.bf16.mxu0 %v1324
        %1357 = vmatpush1.bf16.msra.mxu0 %v1323
        %1358 = vmatprep.subr.bf16.mxu0 0
        %1359 = vmatpush2.bf16.msra.mxu0 0
        %1360 = vmatprep.subr.bf16.mxu0 0
        %1361 = vmatpush2.bf16.msra.mxu0 0
        %1362 = vmatprep.subr.bf16.mxu0 0
        %1363 = vmatpush2.bf16.msra.mxu0 0
        %1364 = vmatprep.subr.bf16.mxu0 0
        %1365 = vmatpush2.bf16.msra.mxu0 0
        %1366 = vmatprep.subr.bf16.mxu0 0
        %1367 = vmatpush2.bf16.msra.mxu0 0
        %1368 = vmatprep.subr.bf16.mxu0 0
        %1369 = vmatpush2.bf16.msra.mxu0 0
        %1370 = vmatprep.subr.bf16.mxu0 0
        %1371 = vmatpush2.bf16.msra.mxu0 0
        %1372 = vmatprep.subr.bf16.mxu0 0
        %1373 = vmatpush2.bf16.msra.mxu0 0
        %1374 = vmatprep.mubr.bf16.mxu0 0
        %1375 = vmatmul.mubr.bf16.gmra.mxu0 %v1340
        %v1376 = vpop.f32.mrf.mxu0
        %v1377 = vadd.f32 0.0, %v1376
        %v1378 = vpop.f32.mrf.mxu0
        %v1379 = vadd.f32 0.0, %v1378
        %v1380 = vpop.f32.mrf.mxu0
        %v1381 = vpop.f32.mrf.mxu0
        %1382 = vdwg.mxu0
        %1383 = vmatprep.subr.mxu0 0.0
        %1384 = vmatpush1.msra.mxu0 %v333
        %1385 = vmatprep.subr.mxu0 0.0
        %1386 = vmatpush1.msra.mxu0 %v332
        %1387 = vmatprep.subr.mxu0 0.0
        %1388 = vmatpush1.msra.mxu0 %v331
        %1389 = vmatprep.subr.mxu0 0.0
        %1390 = vmatpush1.msra.mxu0 %v330
        %1391 = vmatprep.subr.mxu0 0.0
        %1392 = vmatpush1.msra.mxu0 %v329
        %1393 = vmatprep.subr.mxu0 0.0
        %1394 = vmatpush1.msra.mxu0 %v328
        %1395 = vmatprep.subr.mxu0 0.0
        %1396 = vmatpush1.msra.mxu0 %v327
        %1397 = vmatprep.subr.mxu0 0.0
        %1398 = vmatpush1.msra.mxu0 %v326
        %1399 = vmatprep.subr.mxu0 0.0
        %1400 = vmatpush1.msra.mxu0 %v325
        %1401 = vmatprep.subr.mxu0 0.0
        %1402 = vmatpush1.msra.mxu0 %v324
        %1403 = vmatprep.subr.mxu0 0.0
        %1404 = vmatpush1.msra.mxu0 %v323
        %1405 = vmatprep.subr.mxu0 0.0
        %1406 = vmatpush1.msra.mxu0 %v322
        %1407 = vmatprep.subr.mxu0 0.0
        %1408 = vmatpush1.msra.mxu0 %v321
        %1409 = vmatprep.subr.mxu0 0.0
        %1410 = vmatpush1.msra.mxu0 %v320
        %1411 = vmatprep.subr.mxu0 0.0
        %1412 = vmatpush1.msra.mxu0 %v319
        %1413 = vmatprep.subr.mxu0 0.0
        %1414 = vmatpush1.msra.mxu0 %v318
        %1415 = vmatprep.subr.mxu0 0.0
        %1416 = vmatpush2.msra.mxu0 %v349
        %1417 = vmatprep.subr.mxu0 0.0
        %1418 = vmatpush2.msra.mxu0 %v348
        %1419 = vmatprep.subr.mxu0 0.0
        %1420 = vmatpush2.msra.mxu0 %v347
        %1421 = vmatprep.subr.mxu0 0.0
        %1422 = vmatpush2.msra.mxu0 %v346
        %1423 = vmatprep.subr.mxu0 0.0
        %1424 = vmatpush2.msra.mxu0 %v345
        %1425 = vmatprep.subr.mxu0 0.0
        %1426 = vmatpush2.msra.mxu0 %v344
        %1427 = vmatprep.subr.mxu0 0.0
        %1428 = vmatpush2.msra.mxu0 %v343
        %1429 = vmatprep.subr.mxu0 0.0
        %1430 = vmatpush2.msra.mxu0 %v342
        %1431 = vmatprep.subr.mxu0 0.0
        %1432 = vmatpush2.msra.mxu0 %v341
        %1433 = vmatprep.subr.mxu0 0.0
        %1434 = vmatpush2.msra.mxu0 %v340
        %1435 = vmatprep.subr.mxu0 0.0
        %1436 = vmatpush2.msra.mxu0 %v339
        %1437 = vmatprep.subr.mxu0 0.0
        %1438 = vmatpush2.msra.mxu0 %v338
        %1439 = vmatprep.subr.mxu0 0.0
        %1440 = vmatpush2.msra.mxu0 %v337
        %1441 = vmatprep.subr.mxu0 0.0
        %1442 = vmatpush2.msra.mxu0 %v336
        %1443 = vmatprep.subr.mxu0 0.0
        %1444 = vmatpush2.msra.mxu0 %v335
        %1445 = vmatprep.subr.mxu0 0.0
        %1446 = vmatpush2.msra.mxu0 %v334
        %1447 = vmatprep.mubr.f32.mxu0 %v1379
        %1448 = vmatmul.mubr.f32.gmra.mxu0 %v1377
        %v1449 = vpop.f32.mrf.mxu0
        %v1450 = vadd.f32 0.0, %v1449
        %v1451 = vpop.f32.mrf.mxu0
        %1452 = vdwg.mxu0
        %v1453 = vmul.f32 %v1377, %v1377
        %v1454 = vmul.f32 %v1379, %v1379
        %1455 = vmatprep.subr.mxu0 0.0
        %1456 = vmatpush1.msra.mxu0 %v333
        %1457 = vmatprep.subr.mxu0 0.0
        %1458 = vmatpush1.msra.mxu0 %v332
        %1459 = vmatprep.subr.mxu0 0.0
        %1460 = vmatpush1.msra.mxu0 %v331
        %1461 = vmatprep.subr.mxu0 0.0
        %1462 = vmatpush1.msra.mxu0 %v330
        %1463 = vmatprep.subr.mxu0 0.0
        %1464 = vmatpush1.msra.mxu0 %v329
        %1465 = vmatprep.subr.mxu0 0.0
        %1466 = vmatpush1.msra.mxu0 %v328
        %1467 = vmatprep.subr.mxu0 0.0
        %1468 = vmatpush1.msra.mxu0 %v327
        %1469 = vmatprep.subr.mxu0 0.0
        %1470 = vmatpush1.msra.mxu0 %v326
        %1471 = vmatprep.subr.mxu0 0.0
        %1472 = vmatpush1.msra.mxu0 %v325
        %1473 = vmatprep.subr.mxu0 0.0
        %1474 = vmatpush1.msra.mxu0 %v324
        %1475 = vmatprep.subr.mxu0 0.0
        %1476 = vmatpush1.msra.mxu0 %v323
        %1477 = vmatprep.subr.mxu0 0.0
        %1478 = vmatpush1.msra.mxu0 %v322
        %1479 = vmatprep.subr.mxu0 0.0
        %1480 = vmatpush1.msra.mxu0 %v321
        %1481 = vmatprep.subr.mxu0 0.0
        %1482 = vmatpush1.msra.mxu0 %v320
        %1483 = vmatprep.subr.mxu0 0.0
        %1484 = vmatpush1.msra.mxu0 %v319
        %1485 = vmatprep.subr.mxu0 0.0
        %1486 = vmatpush1.msra.mxu0 %v318
        %1487 = vmatprep.subr.mxu0 0.0
        %1488 = vmatpush2.msra.mxu0 %v349
        %1489 = vmatprep.subr.mxu0 0.0
        %1490 = vmatpush2.msra.mxu0 %v348
        %1491 = vmatprep.subr.mxu0 0.0
        %1492 = vmatpush2.msra.mxu0 %v347
        %1493 = vmatprep.subr.mxu0 0.0
        %1494 = vmatpush2.msra.mxu0 %v346
        %1495 = vmatprep.subr.mxu0 0.0
        %1496 = vmatpush2.msra.mxu0 %v345
        %1497 = vmatprep.subr.mxu0 0.0
        %1498 = vmatpush2.msra.mxu0 %v344
        %1499 = vmatprep.subr.mxu0 0.0
        %1500 = vmatpush2.msra.mxu0 %v343
        %1501 = vmatprep.subr.mxu0 0.0
        %1502 = vmatpush2.msra.mxu0 %v342
        %1503 = vmatprep.subr.mxu0 0.0
        %1504 = vmatpush2.msra.mxu0 %v341
        %1505 = vmatprep.subr.mxu0 0.0
        %1506 = vmatpush2.msra.mxu0 %v340
        %1507 = vmatprep.subr.mxu0 0.0
        %1508 = vmatpush2.msra.mxu0 %v339
        %1509 = vmatprep.subr.mxu0 0.0
        %1510 = vmatpush2.msra.mxu0 %v338
        %1511 = vmatprep.subr.mxu0 0.0
        %1512 = vmatpush2.msra.mxu0 %v337
        %1513 = vmatprep.subr.mxu0 0.0
        %1514 = vmatpush2.msra.mxu0 %v336
        %1515 = vmatprep.subr.mxu0 0.0
        %1516 = vmatpush2.msra.mxu0 %v335
        %1517 = vmatprep.subr.mxu0 0.0
        %1518 = vmatpush2.msra.mxu0 %v334
        %1519 = vmatprep.mubr.f32.mxu0 %v1454
        %1520 = vmatmul.mubr.f32.gmra.mxu0 %v1453
        %v1521 = vpop.f32.mrf.mxu0
        %v1522 = vadd.f32 0.0, %v1521
        %v1523 = vpop.f32.mrf.mxu0
        %1524 = vdwg.mxu0
        %v1525 = vmul.f32 %v1450, %v1450
        %v1526 = vsub.f32 %v1522, %v1525
        %v1527 = vmax.f32 %v1526, 0.0
        %v1528 = vadd.f32 %v1527, 1e-05
        %v1529 = vrsqrt.pop %v1528
        %v1531 = vsel %vm603, %v1450, 0
        %1533 = vmatprep.subr.mxu0 0.0
        %1534 = vmatpush1.msra.mxu0 0.0
        %1535 = vmatprep.subr.mxu0 0.0
        %1536 = vmatpush1.msra.mxu0 0.0
        %1537 = vmatprep.subr.mxu0 0.0
        %1538 = vmatpush1.msra.mxu0 0.0
        %1539 = vmatprep.subr.mxu0 0.0
        %1540 = vmatpush1.msra.mxu0 0.0
        %1541 = vmatprep.subr.mxu0 0.0
        %1542 = vmatpush1.msra.mxu0 0.0
        %1543 = vmatprep.subr.mxu0 0.0
        %1544 = vmatpush1.msra.mxu0 0.0
        %1545 = vmatprep.subr.mxu0 0.0
        %1546 = vmatpush1.msra.mxu0 0.0
        %1547 = vmatprep.subr.mxu0 0.0
        %1548 = vmatpush1.msra.mxu0 0.0
        %1549 = vmatprep.subr.mxu0 0.0
        %1550 = vmatpush1.msra.mxu0 0.0
        %1551 = vmatprep.subr.mxu0 0.0
        %1552 = vmatpush1.msra.mxu0 0.0
        %1553 = vmatprep.subr.mxu0 0.0
        %1554 = vmatpush1.msra.mxu0 0.0
        %1555 = vmatprep.subr.mxu0 0.0
        %1556 = vmatpush1.msra.mxu0 0.0
        %1557 = vmatprep.subr.mxu0 0.0
        %1558 = vmatpush1.msra.mxu0 0.0
        %1559 = vmatprep.subr.mxu0 0.0
        %1560 = vmatpush1.msra.mxu0 0.0
        %1561 = vmatprep.subr.mxu0 0.0
        %1562 = vmatpush1.msra.mxu0 0.0
        %1563 = vmatprep.subr.mxu0 %v351
        %1564 = vmatpush1.msra.mxu0 %v350
        %1565 = vmatprep.subr.mxu0 0.0
        %1566 = vmatpush2.msra.mxu0 0.0
        %1567 = vmatprep.subr.mxu0 0.0
        %1568 = vmatpush2.msra.mxu0 0.0
        %1569 = vmatprep.subr.mxu0 0.0
        %1570 = vmatpush2.msra.mxu0 0.0
        %1571 = vmatprep.subr.mxu0 0.0
        %1572 = vmatpush2.msra.mxu0 0.0
        %1573 = vmatprep.subr.mxu0 0.0
        %1574 = vmatpush2.msra.mxu0 0.0
        %1575 = vmatprep.subr.mxu0 0.0
        %1576 = vmatpush2.msra.mxu0 0.0
        %1577 = vmatprep.subr.mxu0 0.0
        %1578 = vmatpush2.msra.mxu0 0.0
        %1579 = vmatprep.subr.mxu0 0.0
        %1580 = vmatpush2.msra.mxu0 0.0
        %1581 = vmatprep.subr.mxu0 0.0
        %1582 = vmatpush2.msra.mxu0 0.0
        %1583 = vmatprep.subr.mxu0 0.0
        %1584 = vmatpush2.msra.mxu0 0.0
        %1585 = vmatprep.subr.mxu0 0.0
        %1586 = vmatpush2.msra.mxu0 0.0
        %1587 = vmatprep.subr.mxu0 0.0
        %1588 = vmatpush2.msra.mxu0 0.0
        %1589 = vmatprep.subr.mxu0 0.0
        %1590 = vmatpush2.msra.mxu0 0.0
        %1591 = vmatprep.subr.mxu0 0.0
        %1592 = vmatpush2.msra.mxu0 0.0
        %1593 = vmatprep.subr.mxu0 0.0
        %1594 = vmatpush2.msra.mxu0 0.0
        %1595 = vmatprep.subr.mxu0 0.0
        %1596 = vmatpush2.msra.mxu0 0.0
        %1597 = vmatprep.mubr.f32.mxu0 0.0
        %1598 = vmatmul.mubr.f32.gmra.mxu0 %v1531
        %v1599 = vpop.f32.mrf.mxu0
        %v1600 = vadd.f32 0.0, %v1599
        %v1601 = vpop.f32.mrf.mxu0
        %v1602 = vadd.f32 0.0, %v1601
        %1603 = vdwg.mxu0
        %v1605 = vsel %vm603, %v1529, 0
        %1607 = vmatprep.subr.mxu0 0.0
        %1608 = vmatpush1.msra.mxu0 0.0
        %1609 = vmatprep.subr.mxu0 0.0
        %1610 = vmatpush1.msra.mxu0 0.0
        %1611 = vmatprep.subr.mxu0 0.0
        %1612 = vmatpush1.msra.mxu0 0.0
        %1613 = vmatprep.subr.mxu0 0.0
        %1614 = vmatpush1.msra.mxu0 0.0
        %1615 = vmatprep.subr.mxu0 0.0
        %1616 = vmatpush1.msra.mxu0 0.0
        %1617 = vmatprep.subr.mxu0 0.0
        %1618 = vmatpush1.msra.mxu0 0.0
        %1619 = vmatprep.subr.mxu0 0.0
        %1620 = vmatpush1.msra.mxu0 0.0
        %1621 = vmatprep.subr.mxu0 0.0
        %1622 = vmatpush1.msra.mxu0 0.0
        %1623 = vmatprep.subr.mxu0 0.0
        %1624 = vmatpush1.msra.mxu0 0.0
        %1625 = vmatprep.subr.mxu0 0.0
        %1626 = vmatpush1.msra.mxu0 0.0
        %1627 = vmatprep.subr.mxu0 0.0
        %1628 = vmatpush1.msra.mxu0 0.0
        %1629 = vmatprep.subr.mxu0 0.0
        %1630 = vmatpush1.msra.mxu0 0.0
        %1631 = vmatprep.subr.mxu0 0.0
        %1632 = vmatpush1.msra.mxu0 0.0
        %1633 = vmatprep.subr.mxu0 0.0
        %1634 = vmatpush1.msra.mxu0 0.0
        %1635 = vmatprep.subr.mxu0 0.0
        %1636 = vmatpush1.msra.mxu0 0.0
        %1637 = vmatprep.subr.mxu0 %v351
        %1638 = vmatpush1.msra.mxu0 %v350
        %1639 = vmatprep.subr.mxu0 0.0
        %1640 = vmatpush2.msra.mxu0 0.0
        %1641 = vmatprep.subr.mxu0 0.0
        %1642 = vmatpush2.msra.mxu0 0.0
        %1643 = vmatprep.subr.mxu0 0.0
        %1644 = vmatpush2.msra.mxu0 0.0
        %1645 = vmatprep.subr.mxu0 0.0
        %1646 = vmatpush2.msra.mxu0 0.0
        %1647 = vmatprep.subr.mxu0 0.0
        %1648 = vmatpush2.msra.mxu0 0.0
        %1649 = vmatprep.subr.mxu0 0.0
        %1650 = vmatpush2.msra.mxu0 0.0
        %1651 = vmatprep.subr.mxu0 0.0
        %1652 = vmatpush2.msra.mxu0 0.0
        %1653 = vmatprep.subr.mxu0 0.0
        %1654 = vmatpush2.msra.mxu0 0.0
        %1655 = vmatprep.subr.mxu0 0.0
        %1656 = vmatpush2.msra.mxu0 0.0
        %1657 = vmatprep.subr.mxu0 0.0
        %1658 = vmatpush2.msra.mxu0 0.0
        %1659 = vmatprep.subr.mxu0 0.0
        %1660 = vmatpush2.msra.mxu0 0.0
        %1661 = vmatprep.subr.mxu0 0.0
        %1662 = vmatpush2.msra.mxu0 0.0
        %1663 = vmatprep.subr.mxu0 0.0
        %1664 = vmatpush2.msra.mxu0 0.0
        %1665 = vmatprep.subr.mxu0 0.0
        %1666 = vmatpush2.msra.mxu0 0.0
        %1667 = vmatprep.subr.mxu0 0.0
        %1668 = vmatpush2.msra.mxu0 0.0
        %1669 = vmatprep.subr.mxu0 0.0
        %1670 = vmatpush2.msra.mxu0 0.0
        %1671 = vmatprep.mubr.f32.mxu0 0.0
        %1672 = vmatmul.mubr.f32.gmra.mxu0 %v1605
        %v1673 = vpop.f32.mrf.mxu0
        %v1674 = vadd.f32 0.0, %v1673
        %v1675 = vpop.f32.mrf.mxu0
        %v1676 = vadd.f32 0.0, %v1675
        %1677 = vdwg.mxu0
        %v1678 = vsub.f32 %v1377, %v1600
        %v1679 = vsub.f32 %v1379, %v1602
        %v1680 = vmul.f32 %v1678, %v1674
        %v1681 = vmul.f32 %v1679, %v1676
        %s1682 = scalar_lea.vmem %s2, 4
        %v1683 = vld [vmem:[%s1682] sm:$0x3]
        %v1685 = vlaneseq
        %v1686 = vshrl.u32 %v1685, 7
        %v1687 = vsub.s32 0, %v1686
        %v1688 = vrot.slane %v1683, %v1687
        %v1689 = vlaneseq
        %v1690 = vshrl.u32 %v1689, 7
        %v1691 = vsub.s32 1, %v1690
        %v1692 = vrot.slane %v1683, %v1691
        %v1695 = vmul.f32 %v1680, %v1688
        %v1696 = vmul.f32 %v1681, %v1692
        %s1697 = scalar_lea.vmem [#allocation4], 4
        %v1698 = vld [vmem:[%s1697] sm:$0x3]
        %v1700 = vlaneseq
        %v1701 = vshrl.u32 %v1700, 7
        %v1702 = vsub.s32 0, %v1701
        %v1703 = vrot.slane %v1698, %v1702
        %v1704 = vlaneseq
        %v1705 = vshrl.u32 %v1704, 7
        %v1706 = vsub.s32 1, %v1705
        %v1707 = vrot.slane %v1698, %v1706
        %v1710 = vadd.f32 %v1695, %v1703
        %v1711 = vadd.f32 %v1696, %v1707
        %v1712 = vadd.f32 %v1710, %v1711
        %v1713 = vxor.u32 %v1712, 2147483648
        %v1714 = vmul.f32 %v1713, 1.442695
        %v1715 = vpow.pop %v1714
        %v1716 = vadd.f32 %v1715, 1.0
        %v1717 = vrcp.pop %v1716
        %v1718 = vmul.f32 1.0, %v1717
        %1720 = vrot.lane.b32.xlu0 %v1711, 96
        %v1721 = vpop.permute.xlu0 %1720
        %v1723 = vmul.f32 %v1718, %v1721
        %1725 = vrot.lane.b32.xlu0 %v1723, 32
        %v1726 = vpop.permute.xlu0 %1725
        %v1728 = vadd.f32 %v1710, %v1726
        %v1729 = vtanh.pop %v1728
        %v1730 = vsub.f32 1.0, %v1718
        %v1731 = vmul.f32 %v1730, %v1280
        %1733 = vrot.lane.b32.xlu0 %v1729, 64
        %v1734 = vpop.permute.xlu0 %1733
        %v1736 = vmul.f32 %v1718, %v1734
        %v1737 = vadd.f32 %v1731, %v1736
        %1738 = vst.msk [vmem:[%s1279] sm:$0xff] %vm810, %v1737
        %s1739 = scalar_lea.vmem %s297, 16 [#allocation9]
        %1740 = vst.msk [vmem:[%s1739] sm:$0xff] %vm810, %v1737
        %s1741 = sand.u32 %s183, 1
        %s1742 = scalar_lea.sflag [#allocation6], %s1741
        %s1743 = sand.u32 %s183, 1
        %s1744 = smul.addr %s1743, 24
        %s1745 = scalar_lea.vmem [#allocation9], %s1744
        // Predicated region
        $region61: #{tpu_custom_call.1} parent=47 // pred_check
          %p1746 = pneg %p193
        $region62: #{tpu_custom_call.1} parent=47 // pred_check_branch
          %1748 = sbr.rel (%p1746) target = $region64
        $region63: #{tpu_custom_call.1} parent=47 // pred_region
          %s1750 = ssub.s32 384, 384
          %1751 = vsyncadd %s1742, %s1750
          %s1752 = smul.addr %s23, 3
          %s1753 = smul.addr %s1752, 128
          %s1754 = scalar_lea.hbm %s7, %s1753
          %s1755 = sshll.u32 %s1745, 4
          %s1756 = int_to_ptr.vmem [resolvable:$true] %s1755
          %1761 = dma.vmem_to_hbm [thread:$0]  %s1756, 384, %s1754, %s1742, 128, 128, 8
        $region64: #{tpu_custom_call.1} parent=47 // pred_fallthru
          _
      $region48: #{tpu_custom_call.1} parent=5 // pred_fallthru
        _
      %p1762 = scmp.le.s32.totalorder 2, %s18
      // Predicated region
      $region65: #{tpu_custom_call.1} parent=5 // pred_check
        %p1763 = pneg %p1762
      $region66: #{tpu_custom_call.1} parent=5 // pred_check_branch
        %1765 = sbr.rel (%p1763) target = $region68
      $region67: #{tpu_custom_call.1} parent=5 // pred_region
        %s1766 = ssub.s32 %s18, 2
        // Predicated region
        $region69: #{tpu_custom_call.1} parent=67 // pred_check
          %p1767 = pneg %p199
        $region70: #{tpu_custom_call.1} parent=67 // pred_check_branch
          %1769 = sbr.rel (%p1767) target = $region72
        $region71: #{tpu_custom_call.1} parent=67 // pred_region
          %s1770 = sand.u32 %s184, 1
          %s1771 = scalar_lea.sflag [#allocation6], %s1770
          %s1772 = sand.u32 %s184, 1
          %s1773 = smul.addr %s1772, 24
          %s1774 = scalar_lea.vmem [#allocation9], %s1773
          %1775 = dma.done %s1771, 384
        $region72: #{tpu_custom_call.1} parent=67 // pred_fallthru
          _
      $region68: #{tpu_custom_call.1} parent=5 // pred_fallthru
        _
    $region6: #{tpu_custom_call.1} parent=1 // loop_footer
      %s22 = sadd.s32 1, %s18
    $region7: #{tpu_custom_call.1} parent=1 // loop_footer_branch
      %17 = sbr.rel target = $region3
    $region8: #{tpu_custom_call.1} parent=1 // loop_exit
      _
    %1776 = vsyncpa [#allocation5], 1
    %s1777 = scalar_lea.sflag [#allocation5], 1
    %1778 = vsyncpa %s1777, 1
    %1779 = vsyncpa [#allocation8], 1
    %1780 = vsyncpa [#allocation6], 1
    %s1781 = scalar_lea.sflag [#allocation6], 1
    %1782 = vsyncpa %s1781, 1

</llo_original>
